<compile_context>
chip_gen: v7x
topology: tpu7x:2x2x1
jax: 0.10.0
libtpu: 0.0.40
codegen_flags: <defaults>
</compile_context>

<pallas_src>
import jax
import jax.numpy as jnp
from jax.experimental import pallas as pl
from jax.experimental.pallas import tpu as pltpu


# Logical and lane-padded feature sizes.
D_IN = 600                      # input dim fed as-is (full-extent last dim)
D_H1,  D_H1_P  = 350, 384
D_H2,  D_H2_P  = 200, 256
D_H3,  D_H3_P  = 70,  128
D_OUT, D_OUT_P = 10,  128


def _mlp_kernel(x_ref,
                w1_ref, b1_ref,
                w2_ref, b2_ref,
                w3_ref, b3_ref,
                w4_ref, b4_ref,
                o_ref):
    # x tile: (TB, 600) f32 -> cast to bf16 in-kernel (avoids host pad/cast pass).
    x = x_ref[...].astype(jnp.bfloat16)

    # fc1 + ReLU  (f32 MXU accumulation throughout)
    h = jnp.dot(x, w1_ref[...], preferred_element_type=jnp.float32)
    h = jnp.maximum(h + b1_ref[...], 0.0)

    # fc2 + ReLU
    h = jnp.dot(h.astype(jnp.bfloat16), w2_ref[...],
                preferred_element_type=jnp.float32)
    h = jnp.maximum(h + b2_ref[...], 0.0)

    # fc3 + ReLU
    h = jnp.dot(h.astype(jnp.bfloat16), w3_ref[...],
                preferred_element_type=jnp.float32)
    h = jnp.maximum(h + b3_ref[...], 0.0)

    # fc4 + Sigmoid (EUP path), store bf16 lane-dense tile
    h = jnp.dot(h.astype(jnp.bfloat16), w4_ref[...],
                preferred_element_type=jnp.float32)
    o_ref[...] = jax.nn.sigmoid(h + b4_ref[...]).astype(o_ref.dtype)


def _round_up(n, m):
    return (n + m - 1) // m * m


def _pad2(a, rows, cols):
    return jnp.pad(a, ((0, rows - a.shape[0]), (0, cols - a.shape[1])))


def prepare_params(params):
    """One-time prep: transpose PyTorch (out,in) weights to (in,out), zero-pad
    output dims to lane multiples, cast weights to bf16 and biases to f32 (1,out).
    Call once (outside the per-step jit) and reuse the result."""
    def w(a, rows, cols):
        return _pad2(jnp.asarray(a).T, rows, cols).astype(jnp.bfloat16)

    def b(a, cols):
        a = jnp.asarray(a)
        return jnp.pad(a, (0, cols - a.shape[0]))[None, :].astype(jnp.float32)

    return {
        "w1": w(params["w1"], D_IN,   D_H1_P),
        "w2": w(params["w2"], D_H1_P, D_H2_P),
        "w3": w(params["w3"], D_H2_P, D_H3_P),
        "w4": w(params["w4"], D_H3_P, D_OUT_P),
        "b1": b(params["b1"], D_H1_P),
        "b2": b(params["b2"], D_H2_P),
        "b3": b(params["b3"], D_H3_P),
        "b4": b(params["b4"], D_OUT_P),
    }


def _choose_batch_tiling(B):
    """Pick (TB, b_pad).  16-row granularity (bf16 sublane packing); up to 1024-row
    tiles to amortize per-step overhead; medium batches split into >=2 tiles so the
    v7x megacore 'parallel' axis has work for both TensorCores."""
    TB_MAX = 1024
    b16 = _round_up(B, 16)
    if b16 <= 512:
        tb = b16                                  # tiny batch: single tile
    elif b16 < 2 * TB_MAX:
        tb = _round_up(pl.cdiv(b16, 2), 16)       # medium: exactly 2 tiles
    else:
        tb = TB_MAX                               # large: 1024-row tiles
    return tb, _round_up(b16, tb)


def net_forward(x, prepared):
    """x: [B, 600] float32.  prepared: output of `prepare_params`.
    Returns [B, 10] float32."""
    B = x.shape[0]
    TB, b_pad = _choose_batch_tiling(B)
    grid = (b_pad // TB,)

    # Only pad batch rows if needed (no column pad / no dtype cast on the host).
    xp = x if b_pad == B else jnp.pad(x, ((0, b_pad - B), (0, 0)))

    # x / out tiles move with the batch grid index; weights & biases stay resident
    # (index map always returns block (0, 0)).
    x_spec   = pl.BlockSpec((TB, D_IN),    lambda i: (i, 0))
    out_spec = pl.BlockSpec((TB, D_OUT_P), lambda i: (i, 0))

    def _resident(shape):
        # Full-extent block, pinned to block (0, 0) for every grid step.
        return pl.BlockSpec(shape, lambda i: (0, 0))

    in_specs = [
        x_spec,
        _resident(prepared["w1"].shape), _resident(prepared["b1"].shape),
        _resident(prepared["w2"].shape), _resident(prepared["b2"].shape),
        _resident(prepared["w3"].shape), _resident(prepared["b3"].shape),
        _resident(prepared["w4"].shape), _resident(prepared["b4"].shape),
    ]

    out_padded = pl.pallas_call(
        _mlp_kernel,
        out_shape=jax.ShapeDtypeStruct((b_pad, D_OUT_P), jnp.bfloat16),
        grid=grid,
        in_specs=in_specs,
        out_specs=out_spec,
        compiler_params=pltpu.CompilerParams(
            dimension_semantics=("parallel",),
            vmem_limit_bytes=32 * 1024 * 1024,  # few MB actually used; ample headroom
        ),
    )(xp,
      prepared["w1"], prepared["b1"],
      prepared["w2"], prepared["b2"],
      prepared["w3"], prepared["b3"],
      prepared["w4"], prepared["b4"])

    return out_padded[:B, :D_OUT].astype(jnp.float32)


def init_params(key):
    """Deterministic init mirroring nn.Linear default (uniform +-1/sqrt(fan_in))."""
    sizes = [(350, 600), (200, 350), (70, 200), (10, 70)]
    params = {}
    for i, (fan_out, fan_in) in enumerate(sizes, start=1):
        key, kw, kb = jax.random.split(key, 3)
        bound = 1.0 / jnp.sqrt(float(fan_in))
        params[f"w{i}"] = jax.random.uniform(
            kw, (fan_out, fan_in), jnp.float32, minval=-bound, maxval=bound)
        params[f"b{i}"] = jax.random.uniform(
            kb, (fan_out,), jnp.float32, minval=-bound, maxval=bound)
    return params


def _reference_forward(x, params):
    h = jnp.maximum(x @ params["w1"].T + params["b1"], 0.0)
    h = jnp.maximum(h @ params["w2"].T + params["b2"], 0.0)
    h = jnp.maximum(h @ params["w3"].T + params["b3"], 0.0)
    h = h @ params["w4"].T + params["b4"]
    return jax.nn.sigmoid(h)


if __name__ == "__main__":
    key = jax.random.PRNGKey(0)
    key, kx = jax.random.split(key)

    B = 8  # small batch
    x = jax.random.normal(kx, (B, 600), jnp.float32)
    params = init_params(key)

    # One-time weight prep (transpose / pad / bf16 cast), reused across calls.
    prepared = jax.tree_util.tree_map(jax.block_until_ready, prepare_params(params))

    fwd = jax.jit(net_forward)
    out = jax.block_until_ready(fwd(x, prepared))

    ref = _reference_forward(x, params)
    assert out.shape == (B, 10)
    # bf16 matmuls (f32 accumulation) + bf16 output store: loosened tolerance.
    assert jnp.allclose(out, ref, atol=2e-2, rtol=2e-2), "mismatch vs reference"

    print("KERNEL_OK")
</pallas_src>

<mosaic_0001>
module attributes {stable_mosaic.version = 11 : i64} {
  func.func @_mlp_kernel(%arg0: i32, %arg1: memref<16x600xf32, #tpu.memory_space<vmem>>, %arg2: memref<600x384xbf16, #tpu.memory_space<vmem>>, %arg3: memref<1x384xf32, #tpu.memory_space<vmem>>, %arg4: memref<384x256xbf16, #tpu.memory_space<vmem>>, %arg5: memref<1x256xf32, #tpu.memory_space<vmem>>, %arg6: memref<256x128xbf16, #tpu.memory_space<vmem>>, %arg7: memref<1x128xf32, #tpu.memory_space<vmem>>, %arg8: memref<128x128xbf16, #tpu.memory_space<vmem>>, %arg9: memref<1x128xf32, #tpu.memory_space<vmem>>, %arg10: memref<16x128xbf16, #tpu.memory_space<vmem>>) attributes {dimension_semantics = [#tpu.dimension_semantics<parallel>], iteration_bounds = array<i64: 1>, scalar_prefetch = 0 : i64, scratch_operands = 0 : i64, tpu.core_type = #tpu.core_type<tc>, window_params = [{transform_indices = @transform_0, window_bounds = array<i64: 16, 600>}, {pipeline_mode = #tpu.pipeline_mode<synchronous>, transform_indices = @transform_1, window_bounds = array<i64: 600, 384>}, {pipeline_mode = #tpu.pipeline_mode<synchronous>, transform_indices = @transform_2, window_bounds = array<i64: 1, 384>}, {pipeline_mode = #tpu.pipeline_mode<synchronous>, transform_indices = @transform_3, window_bounds = array<i64: 384, 256>}, {pipeline_mode = #tpu.pipeline_mode<synchronous>, transform_indices = @transform_4, window_bounds = array<i64: 1, 256>}, {pipeline_mode = #tpu.pipeline_mode<synchronous>, transform_indices = @transform_5, window_bounds = array<i64: 256, 128>}, {pipeline_mode = #tpu.pipeline_mode<synchronous>, transform_indices = @transform_6, window_bounds = array<i64: 1, 128>}, {pipeline_mode = #tpu.pipeline_mode<synchronous>, transform_indices = @transform_7, window_bounds = array<i64: 128, 128>}, {pipeline_mode = #tpu.pipeline_mode<synchronous>, transform_indices = @transform_8, window_bounds = array<i64: 1, 128>}, {transform_indices = @transform_9, window_bounds = array<i64: 16, 128>}]} {
    %c0 = arith.constant 0 : index
    %c0_0 = arith.constant 0 : index
    %0 = vector.load %arg1[%c0, %c0_0] : memref<16x600xf32, #tpu.memory_space<vmem>>, vector<16x600xf32>
    %1 = arith.truncf %0 : vector<16x600xf32> to vector<16x600xbf16>
    %c0_1 = arith.constant 0 : index
    %c0_2 = arith.constant 0 : index
    %2 = vector.load %arg2[%c0_1, %c0_2] : memref<600x384xbf16, #tpu.memory_space<vmem>>, vector<600x384xbf16>
    %cst = arith.constant dense<0.000000e+00> : vector<16x384xf32>
    %3 = tpu.matmul %1, %2, %cst {dimension_numbers = #tpu.dot_dimension_numbers<[1], [0], [0], [1], [0, 0, 1, 1], [], []>} : vector<16x600xbf16>, vector<600x384xbf16>, vector<16x384xf32> -> vector<16x384xf32>
    %c0_3 = arith.constant 0 : index
    %c0_4 = arith.constant 0 : index
    %4 = vector.load %arg3[%c0_3, %c0_4] : memref<1x384xf32, #tpu.memory_space<vmem>>, vector<1x384xf32>
    %5 = vector.broadcast %4 : vector<1x384xf32> to vector<16x384xf32>
    %6 = arith.addf %3, %5 : vector<16x384xf32>
    %cst_5 = arith.constant 0.000000e+00 : f32
    %7 = vector.broadcast %cst_5 : f32 to vector<16x384xf32>
    %8 = arith.maximumf %6, %7 : vector<16x384xf32>
    %9 = arith.truncf %8 : vector<16x384xf32> to vector<16x384xbf16>
    %c0_6 = arith.constant 0 : index
    %c0_7 = arith.constant 0 : index
    %10 = vector.load %arg4[%c0_6, %c0_7] : memref<384x256xbf16, #tpu.memory_space<vmem>>, vector<384x256xbf16>
    %cst_8 = arith.constant dense<0.000000e+00> : vector<16x256xf32>
    %11 = tpu.matmul %9, %10, %cst_8 {dimension_numbers = #tpu.dot_dimension_numbers<[1], [0], [0], [1], [0, 0, 1, 1], [], []>} : vector<16x384xbf16>, vector<384x256xbf16>, vector<16x256xf32> -> vector<16x256xf32>
    %c0_9 = arith.constant 0 : index
    %c0_10 = arith.constant 0 : index
    %12 = vector.load %arg5[%c0_9, %c0_10] : memref<1x256xf32, #tpu.memory_space<vmem>>, vector<1x256xf32>
    %13 = vector.broadcast %12 : vector<1x256xf32> to vector<16x256xf32>
    %14 = arith.addf %11, %13 : vector<16x256xf32>
    %cst_11 = arith.constant 0.000000e+00 : f32
    %15 = vector.broadcast %cst_11 : f32 to vector<16x256xf32>
    %16 = arith.maximumf %14, %15 : vector<16x256xf32>
    %17 = arith.truncf %16 : vector<16x256xf32> to vector<16x256xbf16>
    %c0_12 = arith.constant 0 : index
    %c0_13 = arith.constant 0 : index
    %18 = vector.load %arg6[%c0_12, %c0_13] : memref<256x128xbf16, #tpu.memory_space<vmem>>, vector<256x128xbf16>
    %cst_14 = arith.constant dense<0.000000e+00> : vector<16x128xf32>
    %19 = tpu.matmul %17, %18, %cst_14 {dimension_numbers = #tpu.dot_dimension_numbers<[1], [0], [0], [1], [0, 0, 1, 1], [], []>} : vector<16x256xbf16>, vector<256x128xbf16>, vector<16x128xf32> -> vector<16x128xf32>
    %c0_15 = arith.constant 0 : index
    %c0_16 = arith.constant 0 : index
    %20 = vector.load %arg7[%c0_15, %c0_16] : memref<1x128xf32, #tpu.memory_space<vmem>>, vector<1x128xf32>
    %21 = vector.broadcast %20 : vector<1x128xf32> to vector<16x128xf32>
    %22 = arith.addf %19, %21 : vector<16x128xf32>
    %cst_17 = arith.constant 0.000000e+00 : f32
    %23 = vector.broadcast %cst_17 : f32 to vector<16x128xf32>
    %24 = arith.maximumf %22, %23 : vector<16x128xf32>
    %25 = arith.truncf %24 : vector<16x128xf32> to vector<16x128xbf16>
    %c0_18 = arith.constant 0 : index
    %c0_19 = arith.constant 0 : index
    %26 = vector.load %arg8[%c0_18, %c0_19] : memref<128x128xbf16, #tpu.memory_space<vmem>>, vector<128x128xbf16>
    %cst_20 = arith.constant dense<0.000000e+00> : vector<16x128xf32>
    %27 = tpu.matmul %25, %26, %cst_20 {dimension_numbers = #tpu.dot_dimension_numbers<[1], [0], [0], [1], [0, 0, 1, 1], [], []>} : vector<16x128xbf16>, vector<128x128xbf16>, vector<16x128xf32> -> vector<16x128xf32>
    %c0_21 = arith.constant 0 : index
    %c0_22 = arith.constant 0 : index
    %28 = vector.load %arg9[%c0_21, %c0_22] : memref<1x128xf32, #tpu.memory_space<vmem>>, vector<1x128xf32>
    %29 = vector.broadcast %28 : vector<1x128xf32> to vector<16x128xf32>
    %30 = arith.addf %27, %29 : vector<16x128xf32>
    %31 = arith.negf %30 : vector<16x128xf32>
    %32 = math.exp %31 : vector<16x128xf32>
    %cst_23 = arith.constant 1.000000e+00 : f32
    %33 = vector.broadcast %cst_23 : f32 to vector<16x128xf32>
    %34 = arith.addf %33, %32 : vector<16x128xf32>
    %35 = arith.divf %33, %34 : vector<16x128xf32>
    %36 = arith.truncf %35 : vector<16x128xf32> to vector<16x128xbf16>
    %c0_24 = arith.constant 0 : index
    %c0_25 = arith.constant 0 : index
    %37 = vector.load %arg10[%c0_24, %c0_25] : memref<16x128xbf16, #tpu.memory_space<vmem>>, vector<16x128xbf16>
    tpu.vector_store %arg10[%c0_24, %c0_25], %36 {strides = array<i32>} : memref<16x128xbf16, #tpu.memory_space<vmem>>, vector<16x128xbf16>,
    return
  }
  func.func @transform_0(%arg0: i32) -> (i32, i32) {
    %c0_i32 = arith.constant 0 : i32
    %c0_i32_0 = arith.constant 0 : i32
    return %arg0, %c0_i32 : i32, i32
  }
  func.func @transform_1(%arg0: i32) -> (i32, i32) {
    %c0_i32 = arith.constant 0 : i32
    %c0_i32_0 = arith.constant 0 : i32
    %c0_i32_1 = arith.constant 0 : i32
    return %c0_i32, %c0_i32_0 : i32, i32
  }
  func.func @transform_2(%arg0: i32) -> (i32, i32) {
    %c0_i32 = arith.constant 0 : i32
    %c0_i32_0 = arith.constant 0 : i32
    %c0_i32_1 = arith.constant 0 : i32
    return %c0_i32, %c0_i32_0 : i32, i32
  }
  func.func @transform_3(%arg0: i32) -> (i32, i32) {
    %c0_i32 = arith.constant 0 : i32
    %c0_i32_0 = arith.constant 0 : i32
    %c0_i32_1 = arith.constant 0 : i32
    return %c0_i32, %c0_i32_0 : i32, i32
  }
  func.func @transform_4(%arg0: i32) -> (i32, i32) {
    %c0_i32 = arith.constant 0 : i32
    %c0_i32_0 = arith.constant 0 : i32
    %c0_i32_1 = arith.constant 0 : i32
    return %c0_i32, %c0_i32_0 : i32, i32
  }
  func.func @transform_5(%arg0: i32) -> (i32, i32) {
    %c0_i32 = arith.constant 0 : i32
    %c0_i32_0 = arith.constant 0 : i32
    %c0_i32_1 = arith.constant 0 : i32
    return %c0_i32, %c0_i32_0 : i32, i32
  }
  func.func @transform_6(%arg0: i32) -> (i32, i32) {
    %c0_i32 = arith.constant 0 : i32
    %c0_i32_0 = arith.constant 0 : i32
    %c0_i32_1 = arith.constant 0 : i32
    return %c0_i32, %c0_i32_0 : i32, i32
  }
  func.func @transform_7(%arg0: i32) -> (i32, i32) {
    %c0_i32 = arith.constant 0 : i32
    %c0_i32_0 = arith.constant 0 : i32
    %c0_i32_1 = arith.constant 0 : i32
    return %c0_i32, %c0_i32_0 : i32, i32
  }
  func.func @transform_8(%arg0: i32) -> (i32, i32) {
    %c0_i32 = arith.constant 0 : i32
    %c0_i32_0 = arith.constant 0 : i32
    %c0_i32_1 = arith.constant 0 : i32
    return %c0_i32, %c0_i32_0 : i32, i32
  }
  func.func @transform_9(%arg0: i32) -> (i32, i32) {
    %c0_i32 = arith.constant 0 : i32
    %c0_i32_0 = arith.constant 0 : i32
    return %arg0, %c0_i32 : i32, i32
  }
}

</mosaic_0001>

<llo_original>
// kernel: net_forward.1
$region0: #{net_forward.1}
  #allocation0 [shape = 'u32[]', space=smem, size = 0x4, offset = 0x4, fixed_abs, tag = 'smem constant byte address 0x4 - core index']
  #allocation1 [shape = 'u32[144,128]{1,0:T(1,128)}', space=vmem, size = 0x12000, scoped, tag = 'internal scratch']
  %s0 = inlined_call_operand.vmem [shape: f32[16,600], index: 0, kind: input, shape index: {}]
  %s1 = inlined_call_operand.hbm [shape: bf16[600,384], index: 1, kind: input, shape index: {}]
  %s2 = inlined_call_operand.vmem [shape: f32[1,384], index: 2, kind: input, shape index: {}]
  %s3 = inlined_call_operand.hbm [shape: bf16[384,256], index: 3, kind: input, shape index: {}]
  %s4 = inlined_call_operand.vmem [shape: f32[1,256], index: 4, kind: input, shape index: {}]
  %s5 = inlined_call_operand.vmem [shape: bf16[256,128], index: 5, kind: input, shape index: {}]
  %s6 = inlined_call_operand.vmem [shape: f32[1,128], index: 6, kind: input, shape index: {}]
  %s7 = inlined_call_operand.hbm [shape: bf16[128,128], index: 7, kind: input, shape index: {}]
  %s8 = inlined_call_operand.vmem [shape: f32[1,128], index: 8, kind: input, shape index: {}]
  %s9 = inlined_call_operand.vmem [shape: bf16[16,128], index: 9, kind: output, shape index: {}]
  %s10 = sld [smem:[#allocation0]]
  $region58: #{net_forward.1} parent=0
    _
  %s12 = ssub.s32 1, %s10
  %s13 = scalar_select 0, %s12, %s10
  $region1: #{net_forward.1} parent=0
    #allocation2 [shape = 'u8[460800]{0}', space=vmem, size = 0x70800, scoped, tag = 'input window, operand 1, single buffered']
    #allocation3 [shape = 's32[1]{0}', space=sflag, size = 0x4, scoped, tag = 'scoped memory for net_forward.1']
    #allocation4 [shape = 'u8[196608]{0}', space=vmem, size = 0x30000, scoped, tag = 'input window, operand 3, single buffered']
    #allocation5 [shape = 's32[1]{0}', space=sflag, size = 0x4, scoped, tag = 'scoped memory for net_forward.1']
    #allocation6 [shape = 'u8[32768]{0}', space=vmem, size = 0x8000, scoped, tag = 'input window, operand 7, single buffered']
    %14 = vsyncpa [#allocation3], 0
    %15 = vsyncpa [#allocation5], 0
    // Predicated region
    $region2: #{net_forward.1} parent=1 // pred_check
      _
    $region3: #{net_forward.1} parent=1 // pred_check_branch
      %17 = sbr.rel (0) target = $region5
    $region4: #{net_forward.1} parent=1 // pred_region
      _
    $region5: #{net_forward.1} parent=1 // pred_fallthru
      _
    // Predicated region
    $region6: #{net_forward.1} parent=1 // pred_check
      _
    $region7: #{net_forward.1} parent=1 // pred_check_branch
      %19 = sbr.rel (0) target = $region9
    $region8: #{net_forward.1} parent=1 // pred_region
      %s21 = ssub.s32 14400, 14400
      %22 = vsyncadd [#allocation3], %s21
      %s23 = sshll.u32 [#allocation2], 4
      %s24 = int_to_ptr.vmem [resolvable:$true] %s23
      %29 = dma.hbm_to_vmem [thread:$0]  %s1, 14400, %s24, [#allocation3], 192, 192, 12
    $region9: #{net_forward.1} parent=1 // pred_fallthru
      _
    // Predicated region
    $region10: #{net_forward.1} parent=1 // pred_check
      _
    $region11: #{net_forward.1} parent=1 // pred_check_branch
      %31 = sbr.rel (0) target = $region13
    $region12: #{net_forward.1} parent=1 // pred_region
      _
    $region13: #{net_forward.1} parent=1 // pred_fallthru
      _
    // Predicated region
    $region14: #{net_forward.1} parent=1 // pred_check
      _
    $region15: #{net_forward.1} parent=1 // pred_check_branch
      %33 = sbr.rel (0) target = $region17
    $region16: #{net_forward.1} parent=1 // pred_region
      %s35 = ssub.s32 6144, 6144
      %36 = vsyncadd [#allocation5], %s35
      %s37 = sshll.u32 [#allocation4], 4
      %s38 = int_to_ptr.vmem [resolvable:$true] %s37
      %43 = dma.hbm_to_vmem [thread:$0]  %s3, 6144, %s38, [#allocation5], 128, 128, 8
    $region17: #{net_forward.1} parent=1 // pred_fallthru
      _
    // Predicated region
    $region18: #{net_forward.1} parent=1 // pred_check
      _
    $region19: #{net_forward.1} parent=1 // pred_check_branch
      %45 = sbr.rel (0) target = $region21
    $region20: #{net_forward.1} parent=1 // pred_region
      _
    $region21: #{net_forward.1} parent=1 // pred_fallthru
      _
    // Predicated region
    $region22: #{net_forward.1} parent=1 // pred_check
      _
    $region23: #{net_forward.1} parent=1 // pred_check_branch
      %47 = sbr.rel (0) target = $region25
    $region24: #{net_forward.1} parent=1 // pred_region
      _
    $region25: #{net_forward.1} parent=1 // pred_fallthru
      _
    // Predicated region
    $region26: #{net_forward.1} parent=1 // pred_check
      _
    $region27: #{net_forward.1} parent=1 // pred_check_branch
      %49 = sbr.rel (0) target = $region29
    $region28: #{net_forward.1} parent=1 // pred_region
      _
    $region29: #{net_forward.1} parent=1 // pred_fallthru
      _
    // Predicated region
    $region30: #{net_forward.1} parent=1 // pred_check
      _
    $region31: #{net_forward.1} parent=1 // pred_check_branch
      %51 = sbr.rel (0) target = $region33
    $region32: #{net_forward.1} parent=1 // pred_region
      %s53 = ssub.s32 1024, 1024
      %54 = vsyncadd [#allocation5], %s53
      %s55 = sshll.u32 [#allocation6], 4
      %s56 = int_to_ptr.vmem [resolvable:$true] %s55
      %61 = dma.hbm_to_vmem [thread:$0]  %s7, 1024, %s56, [#allocation5], 64, 64, 4
    $region33: #{net_forward.1} parent=1 // pred_fallthru
      _
    // Predicated region
    $region34: #{net_forward.1} parent=1 // pred_check
      _
    $region35: #{net_forward.1} parent=1 // pred_check_branch
      %63 = sbr.rel (0) target = $region37
    $region36: #{net_forward.1} parent=1 // pred_region
      _
    $region37: #{net_forward.1} parent=1 // pred_fallthru
      _
    // Predicated region
    $region38: #{net_forward.1} parent=1 // pred_check
      _
    $region39: #{net_forward.1} parent=1 // pred_check_branch
      %65 = sbr.rel (0) target = $region41
    $region40: #{net_forward.1} parent=1 // pred_region
      %66 = dma.done [#allocation3], 14400
    $region41: #{net_forward.1} parent=1 // pred_fallthru
      _
    // Predicated region
    $region42: #{net_forward.1} parent=1 // pred_check
      _
    $region43: #{net_forward.1} parent=1 // pred_check_branch
      %68 = sbr.rel (0) target = $region45
    $region44: #{net_forward.1} parent=1 // pred_region
      %69 = dma.done [#allocation5], 6144
    $region45: #{net_forward.1} parent=1 // pred_fallthru
      _
    // Predicated region
    $region46: #{net_forward.1} parent=1 // pred_check
      _
    $region47: #{net_forward.1} parent=1 // pred_check_branch
      %71 = sbr.rel (0) target = $region49
    $region48: #{net_forward.1} parent=1 // pred_region
      %72 = dma.done [#allocation5], 1024
    $region49: #{net_forward.1} parent=1 // pred_fallthru
      _
    %v74 = vld [vmem:[%s0] sm:$0xff]
    %v75 = vld [vmem:[%s0 + $0x8] sm:$0xff]
    %v76 = vld [vmem:[%s0 + $0x10] sm:$0xff]
    %v77 = vld [vmem:[%s0 + $0x18] sm:$0xff]
    %v78 = vld [vmem:[%s0 + $0x20] sm:$0xff]
    %v79 = vld [vmem:[%s0 + $0x28] sm:$0xff]
    %v80 = vld [vmem:[%s0 + $0x30] sm:$0xff]
    %v81 = vld [vmem:[%s0 + $0x38] sm:$0xff]
    %v82 = vld [vmem:[%s0 + $0x40] sm:$0xff]
    %v83 = vld [vmem:[%s0 + $0x48] sm:$0xff]
    %v84 = vpack.c.bf16 %v79, %v74
    %v85 = vpack.c.bf16 %v80, %v75
    %v86 = vpack.c.bf16 %v81, %v76
    %v87 = vpack.c.bf16 %v82, %v77
    %v88 = vpack.c.bf16 %v83, %v78
    %v89 = vld [vmem:[#allocation2] sm:$0xff]
    %v90 = vld [vmem:[#allocation2 + $0x8] sm:$0xf]
    %v91 = vld [vmem:[#allocation2 + $0xc] sm:$0xff]
    %v92 = vld [vmem:[#allocation2 + $0x14] sm:$0xf]
    %v93 = vld [vmem:[#allocation2 + $0x18] sm:$0xff]
    %v94 = vld [vmem:[#allocation2 + $0x20] sm:$0xf]
    %v95 = vld [vmem:[#allocation2 + $0x24] sm:$0xff]
    %v96 = vld [vmem:[#allocation2 + $0x2c] sm:$0xf]
    %v97 = vld [vmem:[#allocation2 + $0x30] sm:$0xff]
    %v98 = vld [vmem:[#allocation2 + $0x38] sm:$0xf]
    %v99 = vld [vmem:[#allocation2 + $0x3c] sm:$0xff]
    %v100 = vld [vmem:[#allocation2 + $0x44] sm:$0xf]
    %v101 = vld [vmem:[#allocation2 + $0x48] sm:$0xff]
    %v102 = vld [vmem:[#allocation2 + $0x50] sm:$0xf]
    %v103 = vld [vmem:[#allocation2 + $0x54] sm:$0xff]
    %v104 = vld [vmem:[#allocation2 + $0x5c] sm:$0xf]
    %v105 = vld [vmem:[#allocation2 + $0x60] sm:$0xff]
    %v106 = vld [vmem:[#allocation2 + $0x68] sm:$0xf]
    %v107 = vld [vmem:[#allocation2 + $0x6c] sm:$0xff]
    %v108 = vld [vmem:[#allocation2 + $0x74] sm:$0xf]
    %v109 = vld [vmem:[#allocation2 + $0x78] sm:$0xff]
    %v110 = vld [vmem:[#allocation2 + $0x80] sm:$0xf]
    %v111 = vld [vmem:[#allocation2 + $0x84] sm:$0xff]
    %v112 = vld [vmem:[#allocation2 + $0x8c] sm:$0xf]
    %v113 = vld [vmem:[#allocation2 + $0x90] sm:$0xff]
    %v114 = vld [vmem:[#allocation2 + $0x98] sm:$0xf]
    %v115 = vld [vmem:[#allocation2 + $0x9c] sm:$0xff]
    %v116 = vld [vmem:[#allocation2 + $0xa4] sm:$0xf]
    %v117 = vld [vmem:[#allocation2 + $0xa8] sm:$0xff]
    %v118 = vld [vmem:[#allocation2 + $0xb0] sm:$0xf]
    %v119 = vld [vmem:[#allocation2 + $0xb4] sm:$0xff]
    %v120 = vld [vmem:[#allocation2 + $0xbc] sm:$0xf]
    %v121 = vld [vmem:[#allocation2 + $0xc0] sm:$0xff]
    %v122 = vld [vmem:[#allocation2 + $0xc8] sm:$0xf]
    %v123 = vld [vmem:[#allocation2 + $0xcc] sm:$0xff]
    %v124 = vld [vmem:[#allocation2 + $0xd4] sm:$0xf]
    %v125 = vld [vmem:[#allocation2 + $0xd8] sm:$0xff]
    %v126 = vld [vmem:[#allocation2 + $0xe0] sm:$0xf]
    %v127 = vld [vmem:[#allocation2 + $0xe4] sm:$0xff]
    %v128 = vld [vmem:[#allocation2 + $0xec] sm:$0xf]
    %v129 = vld [vmem:[#allocation2 + $0xf0] sm:$0xff]
    %v130 = vld [vmem:[#allocation2 + $0xf8] sm:$0xf]
    %v131 = vld [vmem:[#allocation2 + $0xfc] sm:$0xff]
    %v132 = vld [vmem:[#allocation2 + $0x104] sm:$0xf]
    %v133 = vld [vmem:[#allocation2 + $0x108] sm:$0xff]
    %v134 = vld [vmem:[#allocation2 + $0x110] sm:$0xf]
    %v135 = vld [vmem:[#allocation2 + $0x114] sm:$0xff]
    %v136 = vld [vmem:[#allocation2 + $0x11c] sm:$0xf]
    %v137 = vld [vmem:[#allocation2 + $0x120] sm:$0xff]
    %v138 = vld [vmem:[#allocation2 + $0x128] sm:$0xf]
    %v139 = vld [vmem:[#allocation2 + $0x12c] sm:$0xff]
    %v140 = vld [vmem:[#allocation2 + $0x134] sm:$0xf]
    %v141 = vld [vmem:[#allocation2 + $0x138] sm:$0xff]
    %v142 = vld [vmem:[#allocation2 + $0x140] sm:$0xf]
    %v143 = vld [vmem:[#allocation2 + $0x144] sm:$0xff]
    %v144 = vld [vmem:[#allocation2 + $0x14c] sm:$0xf]
    %v145 = vld [vmem:[#allocation2 + $0x150] sm:$0xff]
    %v146 = vld [vmem:[#allocation2 + $0x158] sm:$0xf]
    %v147 = vld [vmem:[#allocation2 + $0x15c] sm:$0xff]
    %v148 = vld [vmem:[#allocation2 + $0x164] sm:$0xf]
    %v149 = vld [vmem:[#allocation2 + $0x168] sm:$0xff]
    %v150 = vld [vmem:[#allocation2 + $0x170] sm:$0xf]
    %v151 = vld [vmem:[#allocation2 + $0x174] sm:$0xff]
    %v152 = vld [vmem:[#allocation2 + $0x17c] sm:$0xf]
    %v153 = vld [vmem:[#allocation2 + $0x180] sm:$0xff]
    %v154 = vld [vmem:[#allocation2 + $0x188] sm:$0xf]
    %v155 = vld [vmem:[#allocation2 + $0x18c] sm:$0xff]
    %v156 = vld [vmem:[#allocation2 + $0x194] sm:$0xf]
    %v157 = vld [vmem:[#allocation2 + $0x198] sm:$0xff]
    %v158 = vld [vmem:[#allocation2 + $0x1a0] sm:$0xf]
    %v159 = vld [vmem:[#allocation2 + $0x1a4] sm:$0xff]
    %v160 = vld [vmem:[#allocation2 + $0x1ac] sm:$0xf]
    %v161 = vld [vmem:[#allocation2 + $0x1b0] sm:$0xff]
    %v162 = vld [vmem:[#allocation2 + $0x1b8] sm:$0xf]
    %v163 = vld [vmem:[#allocation2 + $0x1bc] sm:$0xff]
    %v164 = vld [vmem:[#allocation2 + $0x1c4] sm:$0xf]
    %v165 = vld [vmem:[#allocation2 + $0x1c8] sm:$0xff]
    %v166 = vld [vmem:[#allocation2 + $0x1d0] sm:$0xf]
    %v167 = vld [vmem:[#allocation2 + $0x1d4] sm:$0xff]
    %v168 = vld [vmem:[#allocation2 + $0x1dc] sm:$0xf]
    %v169 = vld [vmem:[#allocation2 + $0x1e0] sm:$0xff]
    %v170 = vld [vmem:[#allocation2 + $0x1e8] sm:$0xf]
    %v171 = vld [vmem:[#allocation2 + $0x1ec] sm:$0xff]
    %v172 = vld [vmem:[#allocation2 + $0x1f4] sm:$0xf]
    %v173 = vld [vmem:[#allocation2 + $0x1f8] sm:$0xff]
    %v174 = vld [vmem:[#allocation2 + $0x200] sm:$0xf]
    %v175 = vld [vmem:[#allocation2 + $0x204] sm:$0xff]
    %v176 = vld [vmem:[#allocation2 + $0x20c] sm:$0xf]
    %v177 = vld [vmem:[#allocation2 + $0x210] sm:$0xff]
    %v178 = vld [vmem:[#allocation2 + $0x218] sm:$0xf]
    %v179 = vld [vmem:[#allocation2 + $0x21c] sm:$0xff]
    %v180 = vld [vmem:[#allocation2 + $0x224] sm:$0xf]
    %v181 = vld [vmem:[#allocation2 + $0x228] sm:$0xff]
    %v182 = vld [vmem:[#allocation2 + $0x230] sm:$0xf]
    %v183 = vld [vmem:[#allocation2 + $0x234] sm:$0xff]
    %v184 = vld [vmem:[#allocation2 + $0x23c] sm:$0xf]
    %v185 = vld [vmem:[#allocation2 + $0x240] sm:$0xff]
    %v186 = vld [vmem:[#allocation2 + $0x248] sm:$0xf]
    %v187 = vld [vmem:[#allocation2 + $0x24c] sm:$0xff]
    %v188 = vld [vmem:[#allocation2 + $0x254] sm:$0xf]
    %v189 = vld [vmem:[#allocation2 + $0x258] sm:$0xff]
    %v190 = vld [vmem:[#allocation2 + $0x260] sm:$0xf]
    %v191 = vld [vmem:[#allocation2 + $0x264] sm:$0xff]
    %v192 = vld [vmem:[#allocation2 + $0x26c] sm:$0xf]
    %v193 = vld [vmem:[#allocation2 + $0x270] sm:$0xff]
    %v194 = vld [vmem:[#allocation2 + $0x278] sm:$0xf]
    %v195 = vld [vmem:[#allocation2 + $0x27c] sm:$0xff]
    %v196 = vld [vmem:[#allocation2 + $0x284] sm:$0xf]
    %v197 = vld [vmem:[#allocation2 + $0x288] sm:$0xff]
    %v198 = vld [vmem:[#allocation2 + $0x290] sm:$0xf]
    %v199 = vld [vmem:[#allocation2 + $0x294] sm:$0xff]
    %v200 = vld [vmem:[#allocation2 + $0x29c] sm:$0xf]
    %v201 = vld [vmem:[#allocation2 + $0x2a0] sm:$0xff]
    %v202 = vld [vmem:[#allocation2 + $0x2a8] sm:$0xf]
    %v203 = vld [vmem:[#allocation2 + $0x2ac] sm:$0xff]
    %v204 = vld [vmem:[#allocation2 + $0x2b4] sm:$0xf]
    %v205 = vld [vmem:[#allocation2 + $0x2b8] sm:$0xff]
    %v206 = vld [vmem:[#allocation2 + $0x2c0] sm:$0xf]
    %v207 = vld [vmem:[#allocation2 + $0x2c4] sm:$0xff]
    %v208 = vld [vmem:[#allocation2 + $0x2cc] sm:$0xf]
    %v209 = vld [vmem:[#allocation2 + $0x2d0] sm:$0xff]
    %v210 = vld [vmem:[#allocation2 + $0x2d8] sm:$0xf]
    %v211 = vld [vmem:[#allocation2 + $0x2dc] sm:$0xff]
    %v212 = vld [vmem:[#allocation2 + $0x2e4] sm:$0xf]
    %v213 = vld [vmem:[#allocation2 + $0x2e8] sm:$0xff]
    %v214 = vld [vmem:[#allocation2 + $0x2f0] sm:$0xf]
    %v215 = vld [vmem:[#allocation2 + $0x2f4] sm:$0xff]
    %v216 = vld [vmem:[#allocation2 + $0x2fc] sm:$0xf]
    %v217 = vld [vmem:[#allocation2 + $0x300] sm:$0xff]
    %v218 = vld [vmem:[#allocation2 + $0x308] sm:$0xf]
    %v219 = vld [vmem:[#allocation2 + $0x30c] sm:$0xff]
    %v220 = vld [vmem:[#allocation2 + $0x314] sm:$0xf]
    %v221 = vld [vmem:[#allocation2 + $0x318] sm:$0xff]
    %v222 = vld [vmem:[#allocation2 + $0x320] sm:$0xf]
    %v223 = vld [vmem:[#allocation2 + $0x324] sm:$0xff]
    %v224 = vld [vmem:[#allocation2 + $0x32c] sm:$0xf]
    %v225 = vld [vmem:[#allocation2 + $0x330] sm:$0xff]
    %v226 = vld [vmem:[#allocation2 + $0x338] sm:$0xf]
    %v227 = vld [vmem:[#allocation2 + $0x33c] sm:$0xff]
    %v228 = vld [vmem:[#allocation2 + $0x344] sm:$0xf]
    %v229 = vld [vmem:[#allocation2 + $0x348] sm:$0xff]
    %v230 = vld [vmem:[#allocation2 + $0x350] sm:$0xf]
    %v231 = vld [vmem:[#allocation2 + $0x354] sm:$0xff]
    %v232 = vld [vmem:[#allocation2 + $0x35c] sm:$0xf]
    %v233 = vld [vmem:[#allocation2 + $0x360] sm:$0xff]
    %v234 = vld [vmem:[#allocation2 + $0x368] sm:$0xf]
    %v235 = vld [vmem:[#allocation2 + $0x36c] sm:$0xff]
    %v236 = vld [vmem:[#allocation2 + $0x374] sm:$0xf]
    %v237 = vld [vmem:[#allocation2 + $0x378] sm:$0xff]
    %v238 = vld [vmem:[#allocation2 + $0x380] sm:$0xf]
    %v239 = vld [vmem:[%s2] sm:$0x7]
    %v241 = vlaneseq
    %v242 = vshrl.u32 %v241, 7
    %v243 = vsub.s32 0, %v242
    %v244 = vrot.slane %v239, %v243
    %v245 = vlaneseq
    %v246 = vshrl.u32 %v245, 7
    %v247 = vsub.s32 1, %v246
    %v248 = vrot.slane %v239, %v247
    %v249 = vlaneseq
    %v250 = vshrl.u32 %v249, 7
    %v251 = vsub.s32 2, %v250
    %v252 = vrot.slane %v239, %v251
    %v406 = vunpack.c.l.b16 %v89
    %v407 = vunpack.c.h.b16 %v89
    %v408 = vunpack.c.l.b16 %v90
    %v409 = vunpack.c.l.b16 %v91
    %v410 = vunpack.c.h.b16 %v91
    %v411 = vunpack.c.l.b16 %v92
    %v412 = vunpack.c.l.b16 %v93
    %v413 = vunpack.c.h.b16 %v93
    %v414 = vunpack.c.l.b16 %v94
    %v415 = vunpack.c.l.b16 %v95
    %v416 = vunpack.c.h.b16 %v95
    %v417 = vunpack.c.l.b16 %v96
    %v418 = vunpack.c.l.b16 %v97
    %v419 = vunpack.c.h.b16 %v97
    %v420 = vunpack.c.l.b16 %v98
    %v421 = vunpack.c.l.b16 %v99
    %v422 = vunpack.c.h.b16 %v99
    %v423 = vunpack.c.l.b16 %v100
    %v424 = vunpack.c.l.b16 %v101
    %v425 = vunpack.c.h.b16 %v101
    %v426 = vunpack.c.l.b16 %v102
    %v427 = vunpack.c.l.b16 %v103
    %v428 = vunpack.c.h.b16 %v103
    %v429 = vunpack.c.l.b16 %v104
    %v430 = vunpack.c.l.b16 %v105
    %v431 = vunpack.c.h.b16 %v105
    %v432 = vunpack.c.l.b16 %v106
    %v433 = vunpack.c.l.b16 %v107
    %v434 = vunpack.c.h.b16 %v107
    %v435 = vunpack.c.l.b16 %v108
    %v436 = vunpack.c.l.b16 %v109
    %v437 = vunpack.c.h.b16 %v109
    %v438 = vunpack.c.l.b16 %v110
    %v439 = vunpack.c.l.b16 %v111
    %v440 = vunpack.c.h.b16 %v111
    %v441 = vunpack.c.l.b16 %v112
    %v442 = vunpack.c.l.b16 %v113
    %v443 = vunpack.c.h.b16 %v113
    %v444 = vunpack.c.l.b16 %v114
    %v445 = vunpack.c.l.b16 %v115
    %v446 = vunpack.c.h.b16 %v115
    %v447 = vunpack.c.l.b16 %v116
    %v448 = vunpack.c.l.b16 %v117
    %v449 = vunpack.c.h.b16 %v117
    %v450 = vunpack.c.l.b16 %v118
    %v451 = vunpack.c.l.b16 %v119
    %v452 = vunpack.c.h.b16 %v119
    %v453 = vunpack.c.l.b16 %v120
    %v454 = vunpack.c.l.b16 %v121
    %v455 = vunpack.c.h.b16 %v121
    %v456 = vunpack.c.l.b16 %v122
    %v457 = vunpack.c.l.b16 %v123
    %v458 = vunpack.c.h.b16 %v123
    %v459 = vunpack.c.l.b16 %v124
    %v460 = vunpack.c.l.b16 %v125
    %v461 = vunpack.c.h.b16 %v125
    %v462 = vunpack.c.l.b16 %v126
    %v463 = vunpack.c.l.b16 %v127
    %v464 = vunpack.c.h.b16 %v127
    %v465 = vunpack.c.l.b16 %v128
    %v466 = vunpack.c.l.b16 %v129
    %v467 = vunpack.c.h.b16 %v129
    %v468 = vunpack.c.l.b16 %v130
    %v469 = vunpack.c.l.b16 %v131
    %v470 = vunpack.c.h.b16 %v131
    %v471 = vunpack.c.l.b16 %v132
    %v472 = vunpack.c.l.b16 %v133
    %v473 = vunpack.c.h.b16 %v133
    %v474 = vunpack.c.l.b16 %v134
    %v475 = vunpack.c.l.b16 %v135
    %v476 = vunpack.c.h.b16 %v135
    %v477 = vunpack.c.l.b16 %v136
    %v478 = vunpack.c.l.b16 %v137
    %v479 = vunpack.c.h.b16 %v137
    %v480 = vunpack.c.l.b16 %v138
    %v481 = vunpack.c.l.b16 %v139
    %v482 = vunpack.c.h.b16 %v139
    %v483 = vunpack.c.l.b16 %v140
    %v484 = vunpack.c.l.b16 %v141
    %v485 = vunpack.c.h.b16 %v141
    %v486 = vunpack.c.l.b16 %v142
    %v487 = vunpack.c.l.b16 %v143
    %v488 = vunpack.c.h.b16 %v143
    %v489 = vunpack.c.l.b16 %v144
    %v490 = vunpack.c.l.b16 %v145
    %v491 = vunpack.c.h.b16 %v145
    %v492 = vunpack.c.l.b16 %v146
    %v493 = vunpack.c.l.b16 %v147
    %v494 = vunpack.c.h.b16 %v147
    %v495 = vunpack.c.l.b16 %v148
    %v496 = vunpack.c.l.b16 %v149
    %v497 = vunpack.c.h.b16 %v149
    %v498 = vunpack.c.l.b16 %v150
    %v499 = vunpack.c.l.b16 %v151
    %v500 = vunpack.c.h.b16 %v151
    %v501 = vunpack.c.l.b16 %v152
    %v502 = vunpack.c.l.b16 %v153
    %v503 = vunpack.c.h.b16 %v153
    %v504 = vunpack.c.l.b16 %v154
    %v505 = vunpack.c.l.b16 %v155
    %v506 = vunpack.c.h.b16 %v155
    %v507 = vunpack.c.l.b16 %v156
    %v508 = vunpack.c.l.b16 %v157
    %v509 = vunpack.c.h.b16 %v157
    %v510 = vunpack.c.l.b16 %v158
    %v511 = vunpack.c.l.b16 %v159
    %v512 = vunpack.c.h.b16 %v159
    %v513 = vunpack.c.l.b16 %v160
    %v514 = vunpack.c.l.b16 %v161
    %v515 = vunpack.c.h.b16 %v161
    %v516 = vunpack.c.l.b16 %v162
    %v517 = vunpack.c.l.b16 %v163
    %v518 = vunpack.c.h.b16 %v163
    %v519 = vunpack.c.l.b16 %v164
    %v520 = vunpack.c.l.b16 %v165
    %v521 = vunpack.c.h.b16 %v165
    %v522 = vunpack.c.l.b16 %v166
    %v523 = vunpack.c.l.b16 %v167
    %v524 = vunpack.c.h.b16 %v167
    %v525 = vunpack.c.l.b16 %v168
    %v526 = vunpack.c.l.b16 %v169
    %v527 = vunpack.c.h.b16 %v169
    %v528 = vunpack.c.l.b16 %v170
    %v529 = vunpack.c.l.b16 %v171
    %v530 = vunpack.c.h.b16 %v171
    %v531 = vunpack.c.l.b16 %v172
    %v532 = vunpack.c.l.b16 %v173
    %v533 = vunpack.c.h.b16 %v173
    %v534 = vunpack.c.l.b16 %v174
    %v535 = vunpack.c.l.b16 %v175
    %v536 = vunpack.c.h.b16 %v175
    %v537 = vunpack.c.l.b16 %v176
    %v538 = vunpack.c.l.b16 %v177
    %v539 = vunpack.c.h.b16 %v177
    %v540 = vunpack.c.l.b16 %v178
    %v541 = vunpack.c.l.b16 %v179
    %v542 = vunpack.c.h.b16 %v179
    %v543 = vunpack.c.l.b16 %v180
    %v544 = vunpack.c.l.b16 %v181
    %v545 = vunpack.c.h.b16 %v181
    %v546 = vunpack.c.l.b16 %v182
    %v547 = vunpack.c.l.b16 %v183
    %v548 = vunpack.c.h.b16 %v183
    %v549 = vunpack.c.l.b16 %v184
    %v550 = vunpack.c.l.b16 %v185
    %v551 = vunpack.c.h.b16 %v185
    %v552 = vunpack.c.l.b16 %v186
    %v553 = vunpack.c.l.b16 %v187
    %v554 = vunpack.c.h.b16 %v187
    %v555 = vunpack.c.l.b16 %v188
    %v556 = vunpack.c.l.b16 %v189
    %v557 = vunpack.c.h.b16 %v189
    %v558 = vunpack.c.l.b16 %v190
    %v559 = vunpack.c.l.b16 %v191
    %v560 = vunpack.c.h.b16 %v191
    %v561 = vunpack.c.l.b16 %v192
    %v562 = vunpack.c.l.b16 %v193
    %v563 = vunpack.c.h.b16 %v193
    %v564 = vunpack.c.l.b16 %v194
    %v565 = vunpack.c.l.b16 %v195
    %v566 = vunpack.c.h.b16 %v195
    %v567 = vunpack.c.l.b16 %v196
    %v568 = vunpack.c.l.b16 %v197
    %v569 = vunpack.c.h.b16 %v197
    %v570 = vunpack.c.l.b16 %v198
    %v571 = vunpack.c.l.b16 %v199
    %v572 = vunpack.c.h.b16 %v199
    %v573 = vunpack.c.l.b16 %v200
    %v574 = vunpack.c.l.b16 %v201
    %v575 = vunpack.c.h.b16 %v201
    %v576 = vunpack.c.l.b16 %v202
    %v577 = vunpack.c.l.b16 %v203
    %v578 = vunpack.c.h.b16 %v203
    %v579 = vunpack.c.l.b16 %v204
    %v580 = vunpack.c.l.b16 %v205
    %v581 = vunpack.c.h.b16 %v205
    %v582 = vunpack.c.l.b16 %v206
    %v583 = vunpack.c.l.b16 %v207
    %v584 = vunpack.c.h.b16 %v207
    %v585 = vunpack.c.l.b16 %v208
    %v586 = vunpack.c.l.b16 %v209
    %v587 = vunpack.c.h.b16 %v209
    %v588 = vunpack.c.l.b16 %v210
    %v589 = vunpack.c.l.b16 %v211
    %v590 = vunpack.c.h.b16 %v211
    %v591 = vunpack.c.l.b16 %v212
    %v592 = vunpack.c.l.b16 %v213
    %v593 = vunpack.c.h.b16 %v213
    %v594 = vunpack.c.l.b16 %v214
    %v595 = vunpack.c.l.b16 %v215
    %v596 = vunpack.c.h.b16 %v215
    %v597 = vunpack.c.l.b16 %v216
    %v598 = vunpack.c.l.b16 %v217
    %v599 = vunpack.c.h.b16 %v217
    %v600 = vunpack.c.l.b16 %v218
    %v601 = vunpack.c.l.b16 %v219
    %v602 = vunpack.c.h.b16 %v219
    %v603 = vunpack.c.l.b16 %v220
    %v604 = vunpack.c.l.b16 %v221
    %v605 = vunpack.c.h.b16 %v221
    %v606 = vunpack.c.l.b16 %v222
    %v607 = vunpack.c.l.b16 %v223
    %v608 = vunpack.c.h.b16 %v223
    %v609 = vunpack.c.l.b16 %v224
    %v610 = vunpack.c.l.b16 %v225
    %v611 = vunpack.c.h.b16 %v225
    %v612 = vunpack.c.l.b16 %v226
    %v613 = vunpack.c.l.b16 %v227
    %v614 = vunpack.c.h.b16 %v227
    %v615 = vunpack.c.l.b16 %v228
    %v616 = vunpack.c.l.b16 %v229
    %v617 = vunpack.c.h.b16 %v229
    %v618 = vunpack.c.l.b16 %v230
    %v619 = vunpack.c.l.b16 %v231
    %v620 = vunpack.c.h.b16 %v231
    %v621 = vunpack.c.l.b16 %v232
    %v622 = vunpack.c.l.b16 %v233
    %v623 = vunpack.c.h.b16 %v233
    %v624 = vunpack.c.l.b16 %v234
    %v625 = vunpack.c.l.b16 %v235
    %v626 = vunpack.c.h.b16 %v235
    %v627 = vunpack.c.l.b16 %v236
    %v628 = vunpack.c.l.b16 %v237
    %v629 = vunpack.c.h.b16 %v237
    %v630 = vunpack.c.l.b16 %v238
    %v631 = vpack.c.b16 %v409, %v406
    %v632 = vpack.c.b16 %v410, %v407
    %v633 = vpack.c.b16 %v411, %v408
    %v634 = vpack.c.b16 %v415, %v412
    %v635 = vpack.c.b16 %v416, %v413
    %v636 = vpack.c.b16 %v417, %v414
    %v637 = vpack.c.b16 %v421, %v418
    %v638 = vpack.c.b16 %v422, %v419
    %v639 = vpack.c.b16 %v423, %v420
    %v640 = vpack.c.b16 %v427, %v424
    %v641 = vpack.c.b16 %v428, %v425
    %v642 = vpack.c.b16 %v429, %v426
    %v643 = vpack.c.b16 %v433, %v430
    %v644 = vpack.c.b16 %v434, %v431
    %v645 = vpack.c.b16 %v435, %v432
    %v646 = vpack.c.b16 %v439, %v436
    %v647 = vpack.c.b16 %v440, %v437
    %v648 = vpack.c.b16 %v441, %v438
    %v649 = vpack.c.b16 %v445, %v442
    %v650 = vpack.c.b16 %v446, %v443
    %v651 = vpack.c.b16 %v447, %v444
    %v652 = vpack.c.b16 %v451, %v448
    %v653 = vpack.c.b16 %v452, %v449
    %v654 = vpack.c.b16 %v453, %v450
    %v655 = vpack.c.b16 %v457, %v454
    %v656 = vpack.c.b16 %v458, %v455
    %v657 = vpack.c.b16 %v459, %v456
    %v658 = vpack.c.b16 %v463, %v460
    %v659 = vpack.c.b16 %v464, %v461
    %v660 = vpack.c.b16 %v465, %v462
    %v661 = vpack.c.b16 %v469, %v466
    %v662 = vpack.c.b16 %v470, %v467
    %v663 = vpack.c.b16 %v471, %v468
    %v664 = vpack.c.b16 %v475, %v472
    %v665 = vpack.c.b16 %v476, %v473
    %v666 = vpack.c.b16 %v477, %v474
    %v667 = vpack.c.b16 %v481, %v478
    %v668 = vpack.c.b16 %v482, %v479
    %v669 = vpack.c.b16 %v483, %v480
    %v670 = vpack.c.b16 %v487, %v484
    %v671 = vpack.c.b16 %v488, %v485
    %v672 = vpack.c.b16 %v489, %v486
    %v673 = vpack.c.b16 %v493, %v490
    %v674 = vpack.c.b16 %v494, %v491
    %v675 = vpack.c.b16 %v495, %v492
    %v676 = vpack.c.b16 %v499, %v496
    %v677 = vpack.c.b16 %v500, %v497
    %v678 = vpack.c.b16 %v501, %v498
    %v679 = vpack.c.b16 %v505, %v502
    %v680 = vpack.c.b16 %v506, %v503
    %v681 = vpack.c.b16 %v507, %v504
    %v682 = vpack.c.b16 %v511, %v508
    %v683 = vpack.c.b16 %v512, %v509
    %v684 = vpack.c.b16 %v513, %v510
    %v685 = vpack.c.b16 %v517, %v514
    %v686 = vpack.c.b16 %v518, %v515
    %v687 = vpack.c.b16 %v519, %v516
    %v688 = vpack.c.b16 %v523, %v520
    %v689 = vpack.c.b16 %v524, %v521
    %v690 = vpack.c.b16 %v525, %v522
    %v691 = vpack.c.b16 %v529, %v526
    %v692 = vpack.c.b16 %v530, %v527
    %v693 = vpack.c.b16 %v531, %v528
    %v694 = vpack.c.b16 %v535, %v532
    %v695 = vpack.c.b16 %v536, %v533
    %v696 = vpack.c.b16 %v537, %v534
    %v697 = vpack.c.b16 %v541, %v538
    %v698 = vpack.c.b16 %v542, %v539
    %v699 = vpack.c.b16 %v543, %v540
    %v700 = vpack.c.b16 %v547, %v544
    %v701 = vpack.c.b16 %v548, %v545
    %v702 = vpack.c.b16 %v549, %v546
    %v703 = vpack.c.b16 %v553, %v550
    %v704 = vpack.c.b16 %v554, %v551
    %v705 = vpack.c.b16 %v555, %v552
    %v706 = vpack.c.b16 %v559, %v556
    %v707 = vpack.c.b16 %v560, %v557
    %v708 = vpack.c.b16 %v561, %v558
    %v709 = vpack.c.b16 %v565, %v562
    %v710 = vpack.c.b16 %v566, %v563
    %v711 = vpack.c.b16 %v567, %v564
    %v712 = vpack.c.b16 %v571, %v568
    %v713 = vpack.c.b16 %v572, %v569
    %v714 = vpack.c.b16 %v573, %v570
    %v715 = vpack.c.b16 %v577, %v574
    %v716 = vpack.c.b16 %v578, %v575
    %v717 = vpack.c.b16 %v579, %v576
    %v718 = vpack.c.b16 %v583, %v580
    %v719 = vpack.c.b16 %v584, %v581
    %v720 = vpack.c.b16 %v585, %v582
    %v721 = vpack.c.b16 %v589, %v586
    %v722 = vpack.c.b16 %v590, %v587
    %v723 = vpack.c.b16 %v591, %v588
    %v724 = vpack.c.b16 %v595, %v592
    %v725 = vpack.c.b16 %v596, %v593
    %v726 = vpack.c.b16 %v597, %v594
    %v727 = vpack.c.b16 %v601, %v598
    %v728 = vpack.c.b16 %v602, %v599
    %v729 = vpack.c.b16 %v603, %v600
    %v730 = vpack.c.b16 %v607, %v604
    %v731 = vpack.c.b16 %v608, %v605
    %v732 = vpack.c.b16 %v609, %v606
    %v733 = vpack.c.b16 %v613, %v610
    %v734 = vpack.c.b16 %v614, %v611
    %v735 = vpack.c.b16 %v615, %v612
    %v736 = vpack.c.b16 %v619, %v616
    %v737 = vpack.c.b16 %v620, %v617
    %v738 = vpack.c.b16 %v621, %v618
    %v739 = vpack.c.b16 %v625, %v622
    %v740 = vpack.c.b16 %v626, %v623
    %v741 = vpack.c.b16 %v627, %v624
    %v742 = vpack.c.b16 %v628, %v628
    %v743 = vpack.c.b16 %v629, %v629
    %v744 = vpack.c.b16 %v630, %v630
    %vm856 = vcmask 719872
    %v858 = vsel %vm856, %v88, 0
    %vm860 = vcmask 1043456
    %v862 = vsel %vm860, %v742, 0
    %v865 = vsel %vm860, %v743, 0
    %v868 = vsel %vm860, %v744, 0
    %870 = vmatprep.subr.bf16.mxu0 %v632
    %871 = vmatpush1.bf16.msra.mxu0 %v631
    %872 = vmatprep.subr.bf16.mxu0 %v635
    %873 = vmatpush1.bf16.msra.mxu0 %v634
    %874 = vmatprep.subr.bf16.mxu0 %v638
    %875 = vmatpush1.bf16.msra.mxu0 %v637
    %876 = vmatprep.subr.bf16.mxu0 %v641
    %877 = vmatpush1.bf16.msra.mxu0 %v640
    %878 = vmatprep.subr.bf16.mxu0 %v644
    %879 = vmatpush1.bf16.msra.mxu0 %v643
    %880 = vmatprep.subr.bf16.mxu0 %v647
    %881 = vmatpush1.bf16.msra.mxu0 %v646
    %882 = vmatprep.subr.bf16.mxu0 %v650
    %883 = vmatpush1.bf16.msra.mxu0 %v649
    %884 = vmatprep.subr.bf16.mxu0 %v653
    %885 = vmatpush1.bf16.msra.mxu0 %v652
    %886 = vmatprep.subr.bf16.mxu0 %v656
    %887 = vmatpush1.bf16.msra.mxu0 %v655
    %888 = vmatprep.subr.bf16.mxu0 %v659
    %889 = vmatpush1.bf16.msra.mxu0 %v658
    %890 = vmatprep.subr.bf16.mxu0 %v662
    %891 = vmatpush1.bf16.msra.mxu0 %v661
    %892 = vmatprep.subr.bf16.mxu0 %v665
    %893 = vmatpush1.bf16.msra.mxu0 %v664
    %894 = vmatprep.subr.bf16.mxu0 %v668
    %895 = vmatpush1.bf16.msra.mxu0 %v667
    %896 = vmatprep.subr.bf16.mxu0 %v671
    %897 = vmatpush1.bf16.msra.mxu0 %v670
    %898 = vmatprep.subr.bf16.mxu0 %v674
    %899 = vmatpush1.bf16.msra.mxu0 %v673
    %900 = vmatprep.subr.bf16.mxu0 %v677
    %901 = vmatpush1.bf16.msra.mxu0 %v676
    %902 = vmatprep.mubr.bf16.mxu0 %v85
    %903 = vmatmul.mubr.bf16.gmra.mrb[0].mxu0 %v84
    %v904 = vpop.f32.mrb[0].mxu0
    %v905 = vadd.f32 %v244, %v904
    %v906 = vpop.f32.mrb[0].mxu0
    %v907 = vadd.f32 %v248, %v906
    %v908 = vpop.f32.mrb[0].mxu0
    %v909 = vadd.f32 %v244, %v908
    %v910 = vpop.f32.mrb[0].mxu0
    %v911 = vadd.f32 %v248, %v910
    %912 = vdwg.mxu0
    %913 = vmatprep.subr.bf16.mxu0 %v680
    %914 = vmatpush1.bf16.msra.mxu0 %v679
    %915 = vmatprep.subr.bf16.mxu0 %v683
    %916 = vmatpush1.bf16.msra.mxu0 %v682
    %917 = vmatprep.subr.bf16.mxu0 %v686
    %918 = vmatpush1.bf16.msra.mxu0 %v685
    %919 = vmatprep.subr.bf16.mxu0 %v689
    %920 = vmatpush1.bf16.msra.mxu0 %v688
    %921 = vmatprep.subr.bf16.mxu0 %v692
    %922 = vmatpush1.bf16.msra.mxu0 %v691
    %923 = vmatprep.subr.bf16.mxu0 %v695
    %924 = vmatpush1.bf16.msra.mxu0 %v694
    %925 = vmatprep.subr.bf16.mxu0 %v698
    %926 = vmatpush1.bf16.msra.mxu0 %v697
    %927 = vmatprep.subr.bf16.mxu0 %v701
    %928 = vmatpush1.bf16.msra.mxu0 %v700
    %929 = vmatprep.subr.bf16.mxu0 %v704
    %930 = vmatpush1.bf16.msra.mxu0 %v703
    %931 = vmatprep.subr.bf16.mxu0 %v707
    %932 = vmatpush1.bf16.msra.mxu0 %v706
    %933 = vmatprep.subr.bf16.mxu0 %v710
    %934 = vmatpush1.bf16.msra.mxu0 %v709
    %935 = vmatprep.subr.bf16.mxu0 %v713
    %936 = vmatpush1.bf16.msra.mxu0 %v712
    %937 = vmatprep.subr.bf16.mxu0 %v716
    %938 = vmatpush1.bf16.msra.mxu0 %v715
    %939 = vmatprep.subr.bf16.mxu0 %v719
    %940 = vmatpush1.bf16.msra.mxu0 %v718
    %941 = vmatprep.subr.bf16.mxu0 %v722
    %942 = vmatpush1.bf16.msra.mxu0 %v721
    %943 = vmatprep.subr.bf16.mxu0 %v725
    %944 = vmatpush1.bf16.msra.mxu0 %v724
    %945 = vmatprep.mubr.bf16.mxu0 %v87
    %946 = vmatmul.mubr.bf16.gmra.mrb[0].mxu0 %v86
    %v947 = vpop.f32.mrb[0].mxu0
    %v948 = vadd.f32 %v905, %v947
    %v949 = vpop.f32.mrb[0].mxu0
    %v950 = vadd.f32 %v907, %v949
    %v951 = vpop.f32.mrb[0].mxu0
    %v952 = vadd.f32 %v909, %v951
    %v953 = vpop.f32.mrb[0].mxu0
    %v954 = vadd.f32 %v911, %v953
    %955 = vdwg.mxu0
    %956 = vmatprep.subr.bf16.mxu0 %v728
    %957 = vmatpush1.bf16.msra.mxu0 %v727
    %958 = vmatprep.subr.bf16.mxu0 %v731
    %959 = vmatpush1.bf16.msra.mxu0 %v730
    %960 = vmatprep.subr.bf16.mxu0 %v734
    %961 = vmatpush1.bf16.msra.mxu0 %v733
    %962 = vmatprep.subr.bf16.mxu0 %v737
    %963 = vmatpush1.bf16.msra.mxu0 %v736
    %964 = vmatprep.subr.bf16.mxu0 %v740
    %965 = vmatpush1.bf16.msra.mxu0 %v739
    %966 = vmatprep.subr.bf16.mxu0 %v865
    %967 = vmatpush1.bf16.msra.mxu0 %v862
    %968 = vmatprep.subr.bf16.mxu0 0
    %969 = vmatpush1.bf16.msra.mxu0 0
    %970 = vmatprep.subr.bf16.mxu0 0
    %971 = vmatpush1.bf16.msra.mxu0 0
    %972 = vmatprep.subr.bf16.mxu0 0
    %973 = vmatpush1.bf16.msra.mxu0 0
    %974 = vmatprep.subr.bf16.mxu0 0
    %975 = vmatpush1.bf16.msra.mxu0 0
    %976 = vmatprep.subr.bf16.mxu0 0
    %977 = vmatpush1.bf16.msra.mxu0 0
    %978 = vmatprep.subr.bf16.mxu0 0
    %979 = vmatpush1.bf16.msra.mxu0 0
    %980 = vmatprep.subr.bf16.mxu0 0
    %981 = vmatpush1.bf16.msra.mxu0 0
    %982 = vmatprep.subr.bf16.mxu0 0
    %983 = vmatpush1.bf16.msra.mxu0 0
    %984 = vmatprep.subr.bf16.mxu0 0
    %985 = vmatpush1.bf16.msra.mxu0 0
    %986 = vmatprep.subr.bf16.mxu0 0
    %987 = vmatpush1.bf16.msra.mxu0 0
    %988 = vmatprep.mubr.bf16.mxu0 0
    %989 = vmatmul.mubr.bf16.gmra.mrb[0].mxu0 %v858
    %v990 = vpop.f32.mrb[0].mxu0
    %v991 = vadd.f32 %v948, %v990
    %v992 = vpop.f32.mrb[0].mxu0
    %v993 = vadd.f32 %v950, %v992
    %v994 = vpop.f32.mrb[0].mxu0
    %v995 = vadd.f32 %v952, %v994
    %v996 = vpop.f32.mrb[0].mxu0
    %v997 = vadd.f32 %v954, %v996
    %998 = vdwg.mxu0
    %999 = vmatprep.subr.bf16.mxu0 0
    %1000 = vmatpush1.bf16.msra.mxu0 %v633
    %1001 = vmatprep.subr.bf16.mxu0 0
    %1002 = vmatpush1.bf16.msra.mxu0 %v636
    %1003 = vmatprep.subr.bf16.mxu0 0
    %1004 = vmatpush1.bf16.msra.mxu0 %v639
    %1005 = vmatprep.subr.bf16.mxu0 0
    %1006 = vmatpush1.bf16.msra.mxu0 %v642
    %1007 = vmatprep.subr.bf16.mxu0 0
    %1008 = vmatpush1.bf16.msra.mxu0 %v645
    %1009 = vmatprep.subr.bf16.mxu0 0
    %1010 = vmatpush1.bf16.msra.mxu0 %v648
    %1011 = vmatprep.subr.bf16.mxu0 0
    %1012 = vmatpush1.bf16.msra.mxu0 %v651
    %1013 = vmatprep.subr.bf16.mxu0 0
    %1014 = vmatpush1.bf16.msra.mxu0 %v654
    %1015 = vmatprep.subr.bf16.mxu0 0
    %1016 = vmatpush1.bf16.msra.mxu0 %v657
    %1017 = vmatprep.subr.bf16.mxu0 0
    %1018 = vmatpush1.bf16.msra.mxu0 %v660
    %1019 = vmatprep.subr.bf16.mxu0 0
    %1020 = vmatpush1.bf16.msra.mxu0 %v663
    %1021 = vmatprep.subr.bf16.mxu0 0
    %1022 = vmatpush1.bf16.msra.mxu0 %v666
    %1023 = vmatprep.subr.bf16.mxu0 0
    %1024 = vmatpush1.bf16.msra.mxu0 %v669
    %1025 = vmatprep.subr.bf16.mxu0 0
    %1026 = vmatpush1.bf16.msra.mxu0 %v672
    %1027 = vmatprep.subr.bf16.mxu0 0
    %1028 = vmatpush1.bf16.msra.mxu0 %v675
    %1029 = vmatprep.subr.bf16.mxu0 0
    %1030 = vmatpush1.bf16.msra.mxu0 %v678
    %1031 = vmatprep.mubr.bf16.mxu0 %v85
    %1032 = vmatmul.mubr.bf16.gmra.mrb[0].mxu0 %v84
    %v1033 = vpop.f32.mrb[0].mxu0
    %v1034 = vadd.f32 %v252, %v1033
    %v1035 = vpop.f32.mrb[0].mxu0
    %v1036 = vpop.f32.mrb[0].mxu0
    %v1037 = vadd.f32 %v252, %v1036
    %v1038 = vpop.f32.mrb[0].mxu0
    %1039 = vdwg.mxu0
    %1040 = vmatprep.subr.bf16.mxu0 0
    %1041 = vmatpush1.bf16.msra.mxu0 %v681
    %1042 = vmatprep.subr.bf16.mxu0 0
    %1043 = vmatpush1.bf16.msra.mxu0 %v684
    %1044 = vmatprep.subr.bf16.mxu0 0
    %1045 = vmatpush1.bf16.msra.mxu0 %v687
    %1046 = vmatprep.subr.bf16.mxu0 0
    %1047 = vmatpush1.bf16.msra.mxu0 %v690
    %1048 = vmatprep.subr.bf16.mxu0 0
    %1049 = vmatpush1.bf16.msra.mxu0 %v693
    %1050 = vmatprep.subr.bf16.mxu0 0
    %1051 = vmatpush1.bf16.msra.mxu0 %v696
    %1052 = vmatprep.subr.bf16.mxu0 0
    %1053 = vmatpush1.bf16.msra.mxu0 %v699
    %1054 = vmatprep.subr.bf16.mxu0 0
    %1055 = vmatpush1.bf16.msra.mxu0 %v702
    %1056 = vmatprep.subr.bf16.mxu0 0
    %1057 = vmatpush1.bf16.msra.mxu0 %v705
    %1058 = vmatprep.subr.bf16.mxu0 0
    %1059 = vmatpush1.bf16.msra.mxu0 %v708
    %1060 = vmatprep.subr.bf16.mxu0 0
    %1061 = vmatpush1.bf16.msra.mxu0 %v711
    %1062 = vmatprep.subr.bf16.mxu0 0
    %1063 = vmatpush1.bf16.msra.mxu0 %v714
    %1064 = vmatprep.subr.bf16.mxu0 0
    %1065 = vmatpush1.bf16.msra.mxu0 %v717
    %1066 = vmatprep.subr.bf16.mxu0 0
    %1067 = vmatpush1.bf16.msra.mxu0 %v720
    %1068 = vmatprep.subr.bf16.mxu0 0
    %1069 = vmatpush1.bf16.msra.mxu0 %v723
    %1070 = vmatprep.subr.bf16.mxu0 0
    %1071 = vmatpush1.bf16.msra.mxu0 %v726
    %1072 = vmatprep.mubr.bf16.mxu0 %v87
    %1073 = vmatmul.mubr.bf16.gmra.mrb[0].mxu0 %v86
    %v1074 = vpop.f32.mrb[0].mxu0
    %v1075 = vadd.f32 %v1034, %v1074
    %v1076 = vpop.f32.mrb[0].mxu0
    %v1077 = vpop.f32.mrb[0].mxu0
    %v1078 = vadd.f32 %v1037, %v1077
    %v1079 = vpop.f32.mrb[0].mxu0
    %1080 = vdwg.mxu0
    %1081 = vmatprep.subr.bf16.mxu0 0
    %1082 = vmatpush1.bf16.msra.mxu0 %v729
    %1083 = vmatprep.subr.bf16.mxu0 0
    %1084 = vmatpush1.bf16.msra.mxu0 %v732
    %1085 = vmatprep.subr.bf16.mxu0 0
    %1086 = vmatpush1.bf16.msra.mxu0 %v735
    %1087 = vmatprep.subr.bf16.mxu0 0
    %1088 = vmatpush1.bf16.msra.mxu0 %v738
    %1089 = vmatprep.subr.bf16.mxu0 0
    %1090 = vmatpush1.bf16.msra.mxu0 %v741
    %1091 = vmatprep.subr.bf16.mxu0 0
    %1092 = vmatpush1.bf16.msra.mxu0 %v868
    %1093 = vmatprep.subr.bf16.mxu0 0
    %1094 = vmatpush1.bf16.msra.mxu0 0
    %1095 = vmatprep.subr.bf16.mxu0 0
    %1096 = vmatpush1.bf16.msra.mxu0 0
    %1097 = vmatprep.subr.bf16.mxu0 0
    %1098 = vmatpush1.bf16.msra.mxu0 0
    %1099 = vmatprep.subr.bf16.mxu0 0
    %1100 = vmatpush1.bf16.msra.mxu0 0
    %1101 = vmatprep.subr.bf16.mxu0 0
    %1102 = vmatpush1.bf16.msra.mxu0 0
    %1103 = vmatprep.subr.bf16.mxu0 0
    %1104 = vmatpush1.bf16.msra.mxu0 0
    %1105 = vmatprep.subr.bf16.mxu0 0
    %1106 = vmatpush1.bf16.msra.mxu0 0
    %1107 = vmatprep.subr.bf16.mxu0 0
    %1108 = vmatpush1.bf16.msra.mxu0 0
    %1109 = vmatprep.subr.bf16.mxu0 0
    %1110 = vmatpush1.bf16.msra.mxu0 0
    %1111 = vmatprep.subr.bf16.mxu0 0
    %1112 = vmatpush1.bf16.msra.mxu0 0
    %1113 = vmatprep.mubr.bf16.mxu0 0
    %1114 = vmatmul.mubr.bf16.gmra.mrb[0].mxu0 %v858
    %v1115 = vpop.f32.mrb[0].mxu0
    %v1116 = vadd.f32 %v1075, %v1115
    %v1117 = vpop.f32.mrb[0].mxu0
    %v1118 = vpop.f32.mrb[0].mxu0
    %v1119 = vadd.f32 %v1078, %v1118
    %v1120 = vpop.f32.mrb[0].mxu0
    %1121 = vdwg.mxu0
    %v1122 = vmax.f32 %v991, 0.0
    %v1123 = vmax.f32 %v993, 0.0
    %v1124 = vmax.f32 %v1116, 0.0
    %v1125 = vmax.f32 %v995, 0.0
    %v1126 = vmax.f32 %v997, 0.0
    %v1127 = vmax.f32 %v1119, 0.0
    %v1128 = vpack.c.bf16 %v1125, %v1122
    %v1129 = vpack.c.bf16 %v1126, %v1123
    %v1130 = vpack.c.bf16 %v1127, %v1124
    %v1131 = vld [vmem:[#allocation4] sm:$0xff]
    %v1132 = vld [vmem:[#allocation4 + $0x8] sm:$0xff]
    %v1133 = vld [vmem:[#allocation4 + $0x10] sm:$0xff]
    %v1134 = vld [vmem:[#allocation4 + $0x18] sm:$0xff]
    %v1135 = vld [vmem:[#allocation4 + $0x20] sm:$0xff]
    %v1136 = vld [vmem:[#allocation4 + $0x28] sm:$0xff]
    %v1137 = vld [vmem:[#allocation4 + $0x30] sm:$0xff]
    %v1138 = vld [vmem:[#allocation4 + $0x38] sm:$0xff]
    %v1139 = vld [vmem:[#allocation4 + $0x40] sm:$0xff]
    %v1140 = vld [vmem:[#allocation4 + $0x48] sm:$0xff]
    %v1141 = vld [vmem:[#allocation4 + $0x50] sm:$0xff]
    %v1142 = vld [vmem:[#allocation4 + $0x58] sm:$0xff]
    %v1143 = vld [vmem:[#allocation4 + $0x60] sm:$0xff]
    %v1144 = vld [vmem:[#allocation4 + $0x68] sm:$0xff]
    %v1145 = vld [vmem:[#allocation4 + $0x70] sm:$0xff]
    %v1146 = vld [vmem:[#allocation4 + $0x78] sm:$0xff]
    %v1147 = vld [vmem:[#allocation4 + $0x80] sm:$0xff]
    %v1148 = vld [vmem:[#allocation4 + $0x88] sm:$0xff]
    %v1149 = vld [vmem:[#allocation4 + $0x90] sm:$0xff]
    %v1150 = vld [vmem:[#allocation4 + $0x98] sm:$0xff]
    %v1151 = vld [vmem:[#allocation4 + $0xa0] sm:$0xff]
    %v1152 = vld [vmem:[#allocation4 + $0xa8] sm:$0xff]
    %v1153 = vld [vmem:[#allocation4 + $0xb0] sm:$0xff]
    %v1154 = vld [vmem:[#allocation4 + $0xb8] sm:$0xff]
    %v1155 = vld [vmem:[#allocation4 + $0xc0] sm:$0xff]
    %v1156 = vld [vmem:[#allocation4 + $0xc8] sm:$0xff]
    %v1157 = vld [vmem:[#allocation4 + $0xd0] sm:$0xff]
    %v1158 = vld [vmem:[#allocation4 + $0xd8] sm:$0xff]
    %v1159 = vld [vmem:[#allocation4 + $0xe0] sm:$0xff]
    %v1160 = vld [vmem:[#allocation4 + $0xe8] sm:$0xff]
    %v1161 = vld [vmem:[#allocation4 + $0xf0] sm:$0xff]
    %v1162 = vld [vmem:[#allocation4 + $0xf8] sm:$0xff]
    %v1163 = vld [vmem:[#allocation4 + $0x100] sm:$0xff]
    %v1164 = vld [vmem:[#allocation4 + $0x108] sm:$0xff]
    %v1165 = vld [vmem:[#allocation4 + $0x110] sm:$0xff]
    %v1166 = vld [vmem:[#allocation4 + $0x118] sm:$0xff]
    %v1167 = vld [vmem:[#allocation4 + $0x120] sm:$0xff]
    %v1168 = vld [vmem:[#allocation4 + $0x128] sm:$0xff]
    %v1169 = vld [vmem:[#allocation4 + $0x130] sm:$0xff]
    %v1170 = vld [vmem:[#allocation4 + $0x138] sm:$0xff]
    %v1171 = vld [vmem:[#allocation4 + $0x140] sm:$0xff]
    %v1172 = vld [vmem:[#allocation4 + $0x148] sm:$0xff]
    %v1173 = vld [vmem:[#allocation4 + $0x150] sm:$0xff]
    %v1174 = vld [vmem:[#allocation4 + $0x158] sm:$0xff]
    %v1175 = vld [vmem:[#allocation4 + $0x160] sm:$0xff]
    %v1176 = vld [vmem:[#allocation4 + $0x168] sm:$0xff]
    %v1177 = vld [vmem:[#allocation4 + $0x170] sm:$0xff]
    %v1178 = vld [vmem:[#allocation4 + $0x178] sm:$0xff]
    %v1179 = vld [vmem:[%s4] sm:$0x3]
    %v1181 = vlaneseq
    %v1182 = vshrl.u32 %v1181, 7
    %v1183 = vsub.s32 0, %v1182
    %v1184 = vrot.slane %v1179, %v1183
    %v1185 = vlaneseq
    %v1186 = vshrl.u32 %v1185, 7
    %v1187 = vsub.s32 1, %v1186
    %v1188 = vrot.slane %v1179, %v1187
    %v1239 = vunpack.c.l.b16 %v1131
    %v1240 = vunpack.c.h.b16 %v1131
    %v1241 = vunpack.c.l.b16 %v1132
    %v1242 = vunpack.c.h.b16 %v1132
    %v1243 = vunpack.c.l.b16 %v1133
    %v1244 = vunpack.c.h.b16 %v1133
    %v1245 = vunpack.c.l.b16 %v1134
    %v1246 = vunpack.c.h.b16 %v1134
    %v1247 = vunpack.c.l.b16 %v1135
    %v1248 = vunpack.c.h.b16 %v1135
    %v1249 = vunpack.c.l.b16 %v1136
    %v1250 = vunpack.c.h.b16 %v1136
    %v1251 = vunpack.c.l.b16 %v1137
    %v1252 = vunpack.c.h.b16 %v1137
    %v1253 = vunpack.c.l.b16 %v1138
    %v1254 = vunpack.c.h.b16 %v1138
    %v1255 = vunpack.c.l.b16 %v1139
    %v1256 = vunpack.c.h.b16 %v1139
    %v1257 = vunpack.c.l.b16 %v1140
    %v1258 = vunpack.c.h.b16 %v1140
    %v1259 = vunpack.c.l.b16 %v1141
    %v1260 = vunpack.c.h.b16 %v1141
    %v1261 = vunpack.c.l.b16 %v1142
    %v1262 = vunpack.c.h.b16 %v1142
    %v1263 = vunpack.c.l.b16 %v1143
    %v1264 = vunpack.c.h.b16 %v1143
    %v1265 = vunpack.c.l.b16 %v1144
    %v1266 = vunpack.c.h.b16 %v1144
    %v1267 = vunpack.c.l.b16 %v1145
    %v1268 = vunpack.c.h.b16 %v1145
    %v1269 = vunpack.c.l.b16 %v1146
    %v1270 = vunpack.c.h.b16 %v1146
    %v1271 = vunpack.c.l.b16 %v1147
    %v1272 = vunpack.c.h.b16 %v1147
    %v1273 = vunpack.c.l.b16 %v1148
    %v1274 = vunpack.c.h.b16 %v1148
    %v1275 = vunpack.c.l.b16 %v1149
    %v1276 = vunpack.c.h.b16 %v1149
    %v1277 = vunpack.c.l.b16 %v1150
    %v1278 = vunpack.c.h.b16 %v1150
    %v1279 = vunpack.c.l.b16 %v1151
    %v1280 = vunpack.c.h.b16 %v1151
    %v1281 = vunpack.c.l.b16 %v1152
    %v1282 = vunpack.c.h.b16 %v1152
    %v1283 = vunpack.c.l.b16 %v1153
    %v1284 = vunpack.c.h.b16 %v1153
    %v1285 = vunpack.c.l.b16 %v1154
    %v1286 = vunpack.c.h.b16 %v1154
    %v1287 = vunpack.c.l.b16 %v1155
    %v1288 = vunpack.c.h.b16 %v1155
    %v1289 = vunpack.c.l.b16 %v1156
    %v1290 = vunpack.c.h.b16 %v1156
    %v1291 = vunpack.c.l.b16 %v1157
    %v1292 = vunpack.c.h.b16 %v1157
    %v1293 = vunpack.c.l.b16 %v1158
    %v1294 = vunpack.c.h.b16 %v1158
    %v1295 = vunpack.c.l.b16 %v1159
    %v1296 = vunpack.c.h.b16 %v1159
    %v1297 = vunpack.c.l.b16 %v1160
    %v1298 = vunpack.c.h.b16 %v1160
    %v1299 = vunpack.c.l.b16 %v1161
    %v1300 = vunpack.c.h.b16 %v1161
    %v1301 = vunpack.c.l.b16 %v1162
    %v1302 = vunpack.c.h.b16 %v1162
    %v1303 = vunpack.c.l.b16 %v1163
    %v1304 = vunpack.c.h.b16 %v1163
    %v1305 = vunpack.c.l.b16 %v1164
    %v1306 = vunpack.c.h.b16 %v1164
    %v1307 = vunpack.c.l.b16 %v1165
    %v1308 = vunpack.c.h.b16 %v1165
    %v1309 = vunpack.c.l.b16 %v1166
    %v1310 = vunpack.c.h.b16 %v1166
    %v1311 = vunpack.c.l.b16 %v1167
    %v1312 = vunpack.c.h.b16 %v1167
    %v1313 = vunpack.c.l.b16 %v1168
    %v1314 = vunpack.c.h.b16 %v1168
    %v1315 = vunpack.c.l.b16 %v1169
    %v1316 = vunpack.c.h.b16 %v1169
    %v1317 = vunpack.c.l.b16 %v1170
    %v1318 = vunpack.c.h.b16 %v1170
    %v1319 = vunpack.c.l.b16 %v1171
    %v1320 = vunpack.c.h.b16 %v1171
    %v1321 = vunpack.c.l.b16 %v1172
    %v1322 = vunpack.c.h.b16 %v1172
    %v1323 = vunpack.c.l.b16 %v1173
    %v1324 = vunpack.c.h.b16 %v1173
    %v1325 = vunpack.c.l.b16 %v1174
    %v1326 = vunpack.c.h.b16 %v1174
    %v1327 = vunpack.c.l.b16 %v1175
    %v1328 = vunpack.c.h.b16 %v1175
    %v1329 = vunpack.c.l.b16 %v1176
    %v1330 = vunpack.c.h.b16 %v1176
    %v1331 = vunpack.c.l.b16 %v1177
    %v1332 = vunpack.c.h.b16 %v1177
    %v1333 = vunpack.c.l.b16 %v1178
    %v1334 = vunpack.c.h.b16 %v1178
    %v1335 = vpack.c.b16 %v1241, %v1239
    %v1336 = vpack.c.b16 %v1242, %v1240
    %v1337 = vpack.c.b16 %v1245, %v1243
    %v1338 = vpack.c.b16 %v1246, %v1244
    %v1339 = vpack.c.b16 %v1249, %v1247
    %v1340 = vpack.c.b16 %v1250, %v1248
    %v1341 = vpack.c.b16 %v1253, %v1251
    %v1342 = vpack.c.b16 %v1254, %v1252
    %v1343 = vpack.c.b16 %v1257, %v1255
    %v1344 = vpack.c.b16 %v1258, %v1256
    %v1345 = vpack.c.b16 %v1261, %v1259
    %v1346 = vpack.c.b16 %v1262, %v1260
    %v1347 = vpack.c.b16 %v1265, %v1263
    %v1348 = vpack.c.b16 %v1266, %v1264
    %v1349 = vpack.c.b16 %v1269, %v1267
    %v1350 = vpack.c.b16 %v1270, %v1268
    %v1351 = vpack.c.b16 %v1273, %v1271
    %v1352 = vpack.c.b16 %v1274, %v1272
    %v1353 = vpack.c.b16 %v1277, %v1275
    %v1354 = vpack.c.b16 %v1278, %v1276
    %v1355 = vpack.c.b16 %v1281, %v1279
    %v1356 = vpack.c.b16 %v1282, %v1280
    %v1357 = vpack.c.b16 %v1285, %v1283
    %v1358 = vpack.c.b16 %v1286, %v1284
    %v1359 = vpack.c.b16 %v1289, %v1287
    %v1360 = vpack.c.b16 %v1290, %v1288
    %v1361 = vpack.c.b16 %v1293, %v1291
    %v1362 = vpack.c.b16 %v1294, %v1292
    %v1363 = vpack.c.b16 %v1297, %v1295
    %v1364 = vpack.c.b16 %v1298, %v1296
    %v1365 = vpack.c.b16 %v1301, %v1299
    %v1366 = vpack.c.b16 %v1302, %v1300
    %v1367 = vpack.c.b16 %v1305, %v1303
    %v1368 = vpack.c.b16 %v1306, %v1304
    %v1369 = vpack.c.b16 %v1309, %v1307
    %v1370 = vpack.c.b16 %v1310, %v1308
    %v1371 = vpack.c.b16 %v1313, %v1311
    %v1372 = vpack.c.b16 %v1314, %v1312
    %v1373 = vpack.c.b16 %v1317, %v1315
    %v1374 = vpack.c.b16 %v1318, %v1316
    %v1375 = vpack.c.b16 %v1321, %v1319
    %v1376 = vpack.c.b16 %v1322, %v1320
    %v1377 = vpack.c.b16 %v1325, %v1323
    %v1378 = vpack.c.b16 %v1326, %v1324
    %v1379 = vpack.c.b16 %v1329, %v1327
    %v1380 = vpack.c.b16 %v1330, %v1328
    %v1381 = vpack.c.b16 %v1333, %v1331
    %v1382 = vpack.c.b16 %v1334, %v1332
    %1431 = vmatprep.subr.bf16.mxu0 %v1336
    %1432 = vmatpush1.bf16.msra.mxu0 %v1335
    %1433 = vmatprep.subr.bf16.mxu0 %v1338
    %1434 = vmatpush1.bf16.msra.mxu0 %v1337
    %1435 = vmatprep.subr.bf16.mxu0 %v1340
    %1436 = vmatpush1.bf16.msra.mxu0 %v1339
    %1437 = vmatprep.subr.bf16.mxu0 %v1342
    %1438 = vmatpush1.bf16.msra.mxu0 %v1341
    %1439 = vmatprep.subr.bf16.mxu0 %v1344
    %1440 = vmatpush1.bf16.msra.mxu0 %v1343
    %1441 = vmatprep.subr.bf16.mxu0 %v1346
    %1442 = vmatpush1.bf16.msra.mxu0 %v1345
    %1443 = vmatprep.subr.bf16.mxu0 %v1348
    %1444 = vmatpush1.bf16.msra.mxu0 %v1347
    %1445 = vmatprep.subr.bf16.mxu0 %v1350
    %1446 = vmatpush1.bf16.msra.mxu0 %v1349
    %1447 = vmatprep.subr.bf16.mxu0 %v1352
    %1448 = vmatpush1.bf16.msra.mxu0 %v1351
    %1449 = vmatprep.subr.bf16.mxu0 %v1354
    %1450 = vmatpush1.bf16.msra.mxu0 %v1353
    %1451 = vmatprep.subr.bf16.mxu0 %v1356
    %1452 = vmatpush1.bf16.msra.mxu0 %v1355
    %1453 = vmatprep.subr.bf16.mxu0 %v1358
    %1454 = vmatpush1.bf16.msra.mxu0 %v1357
    %1455 = vmatprep.subr.bf16.mxu0 %v1360
    %1456 = vmatpush1.bf16.msra.mxu0 %v1359
    %1457 = vmatprep.subr.bf16.mxu0 %v1362
    %1458 = vmatpush1.bf16.msra.mxu0 %v1361
    %1459 = vmatprep.subr.bf16.mxu0 %v1364
    %1460 = vmatpush1.bf16.msra.mxu0 %v1363
    %1461 = vmatprep.subr.bf16.mxu0 %v1366
    %1462 = vmatpush1.bf16.msra.mxu0 %v1365
    %1463 = vmatprep.mubr.bf16.mxu0 %v1129
    %1464 = vmatmul.mubr.bf16.gmra.mrb[0].mxu0 %v1128
    %v1465 = vpop.f32.mrb[0].mxu0
    %v1466 = vadd.f32 %v1184, %v1465
    %v1467 = vpop.f32.mrb[0].mxu0
    %v1468 = vadd.f32 %v1188, %v1467
    %v1469 = vpop.f32.mrb[0].mxu0
    %v1470 = vadd.f32 %v1184, %v1469
    %v1471 = vpop.f32.mrb[0].mxu0
    %v1472 = vadd.f32 %v1188, %v1471
    %1473 = vdwg.mxu0
    %1474 = vmatprep.subr.bf16.mxu0 %v1368
    %1475 = vmatpush1.bf16.msra.mxu0 %v1367
    %1476 = vmatprep.subr.bf16.mxu0 %v1370
    %1477 = vmatpush1.bf16.msra.mxu0 %v1369
    %1478 = vmatprep.subr.bf16.mxu0 %v1372
    %1479 = vmatpush1.bf16.msra.mxu0 %v1371
    %1480 = vmatprep.subr.bf16.mxu0 %v1374
    %1481 = vmatpush1.bf16.msra.mxu0 %v1373
    %1482 = vmatprep.subr.bf16.mxu0 %v1376
    %1483 = vmatpush1.bf16.msra.mxu0 %v1375
    %1484 = vmatprep.subr.bf16.mxu0 %v1378
    %1485 = vmatpush1.bf16.msra.mxu0 %v1377
    %1486 = vmatprep.subr.bf16.mxu0 %v1380
    %1487 = vmatpush1.bf16.msra.mxu0 %v1379
    %1488 = vmatprep.subr.bf16.mxu0 %v1382
    %1489 = vmatpush1.bf16.msra.mxu0 %v1381
    %1490 = vmatprep.subr.bf16.mxu0 0
    %1491 = vmatpush1.bf16.msra.mxu0 0
    %1492 = vmatprep.subr.bf16.mxu0 0
    %1493 = vmatpush1.bf16.msra.mxu0 0
    %1494 = vmatprep.subr.bf16.mxu0 0
    %1495 = vmatpush1.bf16.msra.mxu0 0
    %1496 = vmatprep.subr.bf16.mxu0 0
    %1497 = vmatpush1.bf16.msra.mxu0 0
    %1498 = vmatprep.subr.bf16.mxu0 0
    %1499 = vmatpush1.bf16.msra.mxu0 0
    %1500 = vmatprep.subr.bf16.mxu0 0
    %1501 = vmatpush1.bf16.msra.mxu0 0
    %1502 = vmatprep.subr.bf16.mxu0 0
    %1503 = vmatpush1.bf16.msra.mxu0 0
    %1504 = vmatprep.subr.bf16.mxu0 0
    %1505 = vmatpush1.bf16.msra.mxu0 0
    %1506 = vmatprep.mubr.bf16.mxu0 0
    %1507 = vmatmul.mubr.bf16.gmra.mrb[0].mxu0 %v1130
    %v1508 = vpop.f32.mrb[0].mxu0
    %v1509 = vadd.f32 %v1466, %v1508
    %v1510 = vpop.f32.mrb[0].mxu0
    %v1511 = vadd.f32 %v1468, %v1510
    %v1512 = vpop.f32.mrb[0].mxu0
    %v1513 = vadd.f32 %v1470, %v1512
    %v1514 = vpop.f32.mrb[0].mxu0
    %v1515 = vadd.f32 %v1472, %v1514
    %1516 = vdwg.mxu0
    %v1517 = vmax.f32 %v1509, 0.0
    %v1518 = vmax.f32 %v1511, 0.0
    %v1519 = vmax.f32 %v1513, 0.0
    %v1520 = vmax.f32 %v1515, 0.0
    %v1521 = vpack.c.bf16 %v1519, %v1517
    %v1522 = vpack.c.bf16 %v1520, %v1518
    %v1523 = vld [vmem:[%s5] sm:$0xf]
    %v1524 = vld [vmem:[%s5 + $0x4] sm:$0xf]
    %v1525 = vld [vmem:[%s5 + $0x8] sm:$0xf]
    %v1526 = vld [vmem:[%s5 + $0xc] sm:$0xf]
    %v1527 = vld [vmem:[%s5 + $0x10] sm:$0xf]
    %v1528 = vld [vmem:[%s5 + $0x14] sm:$0xf]
    %v1529 = vld [vmem:[%s5 + $0x18] sm:$0xf]
    %v1530 = vld [vmem:[%s5 + $0x1c] sm:$0xf]
    %v1531 = vld [vmem:[%s5 + $0x20] sm:$0xf]
    %v1532 = vld [vmem:[%s5 + $0x24] sm:$0xf]
    %v1533 = vld [vmem:[%s5 + $0x28] sm:$0xf]
    %v1534 = vld [vmem:[%s5 + $0x2c] sm:$0xf]
    %v1535 = vld [vmem:[%s5 + $0x30] sm:$0xf]
    %v1536 = vld [vmem:[%s5 + $0x34] sm:$0xf]
    %v1537 = vld [vmem:[%s5 + $0x38] sm:$0xf]
    %v1538 = vld [vmem:[%s5 + $0x3c] sm:$0xf]
    %v1539 = vld [vmem:[%s5 + $0x40] sm:$0xf]
    %v1540 = vld [vmem:[%s5 + $0x44] sm:$0xf]
    %v1541 = vld [vmem:[%s5 + $0x48] sm:$0xf]
    %v1542 = vld [vmem:[%s5 + $0x4c] sm:$0xf]
    %v1543 = vld [vmem:[%s5 + $0x50] sm:$0xf]
    %v1544 = vld [vmem:[%s5 + $0x54] sm:$0xf]
    %v1545 = vld [vmem:[%s5 + $0x58] sm:$0xf]
    %v1546 = vld [vmem:[%s5 + $0x5c] sm:$0xf]
    %v1547 = vld [vmem:[%s5 + $0x60] sm:$0xf]
    %v1548 = vld [vmem:[%s5 + $0x64] sm:$0xf]
    %v1549 = vld [vmem:[%s5 + $0x68] sm:$0xf]
    %v1550 = vld [vmem:[%s5 + $0x6c] sm:$0xf]
    %v1551 = vld [vmem:[%s5 + $0x70] sm:$0xf]
    %v1552 = vld [vmem:[%s5 + $0x74] sm:$0xf]
    %v1553 = vld [vmem:[%s5 + $0x78] sm:$0xf]
    %v1554 = vld [vmem:[%s5 + $0x7c] sm:$0xf]
    %v1555 = vld [vmem:[%s6] sm:$0x1]
    %v1557 = vlaneseq
    %v1558 = vshrl.u32 %v1557, 7
    %v1559 = vsub.s32 0, %v1558
    %v1560 = vrot.slane %v1555, %v1559
    %v1594 = vunpack.c.l.b16 %v1523
    %v1595 = vunpack.c.l.b16 %v1524
    %v1596 = vunpack.c.l.b16 %v1525
    %v1597 = vunpack.c.l.b16 %v1526
    %v1598 = vunpack.c.l.b16 %v1527
    %v1599 = vunpack.c.l.b16 %v1528
    %v1600 = vunpack.c.l.b16 %v1529
    %v1601 = vunpack.c.l.b16 %v1530
    %v1602 = vunpack.c.l.b16 %v1531
    %v1603 = vunpack.c.l.b16 %v1532
    %v1604 = vunpack.c.l.b16 %v1533
    %v1605 = vunpack.c.l.b16 %v1534
    %v1606 = vunpack.c.l.b16 %v1535
    %v1607 = vunpack.c.l.b16 %v1536
    %v1608 = vunpack.c.l.b16 %v1537
    %v1609 = vunpack.c.l.b16 %v1538
    %v1610 = vunpack.c.l.b16 %v1539
    %v1611 = vunpack.c.l.b16 %v1540
    %v1612 = vunpack.c.l.b16 %v1541
    %v1613 = vunpack.c.l.b16 %v1542
    %v1614 = vunpack.c.l.b16 %v1543
    %v1615 = vunpack.c.l.b16 %v1544
    %v1616 = vunpack.c.l.b16 %v1545
    %v1617 = vunpack.c.l.b16 %v1546
    %v1618 = vunpack.c.l.b16 %v1547
    %v1619 = vunpack.c.l.b16 %v1548
    %v1620 = vunpack.c.l.b16 %v1549
    %v1621 = vunpack.c.l.b16 %v1550
    %v1622 = vunpack.c.l.b16 %v1551
    %v1623 = vunpack.c.l.b16 %v1552
    %v1624 = vunpack.c.l.b16 %v1553
    %v1625 = vunpack.c.l.b16 %v1554
    %v1626 = vpack.c.b16 %v1595, %v1594
    %v1627 = vpack.c.b16 %v1597, %v1596
    %v1628 = vpack.c.b16 %v1599, %v1598
    %v1629 = vpack.c.b16 %v1601, %v1600
    %v1630 = vpack.c.b16 %v1603, %v1602
    %v1631 = vpack.c.b16 %v1605, %v1604
    %v1632 = vpack.c.b16 %v1607, %v1606
    %v1633 = vpack.c.b16 %v1609, %v1608
    %v1634 = vpack.c.b16 %v1611, %v1610
    %v1635 = vpack.c.b16 %v1613, %v1612
    %v1636 = vpack.c.b16 %v1615, %v1614
    %v1637 = vpack.c.b16 %v1617, %v1616
    %v1638 = vpack.c.b16 %v1619, %v1618
    %v1639 = vpack.c.b16 %v1621, %v1620
    %v1640 = vpack.c.b16 %v1623, %v1622
    %v1641 = vpack.c.b16 %v1625, %v1624
    %1658 = vmatprep.subr.bf16.mxu0 0
    %1659 = vmatpush1.bf16.msra.mxu0 %v1626
    %1660 = vmatprep.subr.bf16.mxu0 0
    %1661 = vmatpush1.bf16.msra.mxu0 %v1627
    %1662 = vmatprep.subr.bf16.mxu0 0
    %1663 = vmatpush1.bf16.msra.mxu0 %v1628
    %1664 = vmatprep.subr.bf16.mxu0 0
    %1665 = vmatpush1.bf16.msra.mxu0 %v1629
    %1666 = vmatprep.subr.bf16.mxu0 0
    %1667 = vmatpush1.bf16.msra.mxu0 %v1630
    %1668 = vmatprep.subr.bf16.mxu0 0
    %1669 = vmatpush1.bf16.msra.mxu0 %v1631
    %1670 = vmatprep.subr.bf16.mxu0 0
    %1671 = vmatpush1.bf16.msra.mxu0 %v1632
    %1672 = vmatprep.subr.bf16.mxu0 0
    %1673 = vmatpush1.bf16.msra.mxu0 %v1633
    %1674 = vmatprep.subr.bf16.mxu0 0
    %1675 = vmatpush1.bf16.msra.mxu0 %v1634
    %1676 = vmatprep.subr.bf16.mxu0 0
    %1677 = vmatpush1.bf16.msra.mxu0 %v1635
    %1678 = vmatprep.subr.bf16.mxu0 0
    %1679 = vmatpush1.bf16.msra.mxu0 %v1636
    %1680 = vmatprep.subr.bf16.mxu0 0
    %1681 = vmatpush1.bf16.msra.mxu0 %v1637
    %1682 = vmatprep.subr.bf16.mxu0 0
    %1683 = vmatpush1.bf16.msra.mxu0 %v1638
    %1684 = vmatprep.subr.bf16.mxu0 0
    %1685 = vmatpush1.bf16.msra.mxu0 %v1639
    %1686 = vmatprep.subr.bf16.mxu0 0
    %1687 = vmatpush1.bf16.msra.mxu0 %v1640
    %1688 = vmatprep.subr.bf16.mxu0 0
    %1689 = vmatpush1.bf16.msra.mxu0 %v1641
    %1690 = vmatprep.mubr.bf16.mxu0 %v1522
    %1691 = vmatmul.mubr.bf16.gmra.mrb[0].mxu0 %v1521
    %v1692 = vpop.f32.mrb[0].mxu0
    %v1693 = vadd.f32 %v1560, %v1692
    %v1694 = vpop.f32.mrb[0].mxu0
    %v1695 = vpop.f32.mrb[0].mxu0
    %v1696 = vadd.f32 %v1560, %v1695
    %v1697 = vpop.f32.mrb[0].mxu0
    %1698 = vdwg.mxu0
    %v1699 = vmax.f32 %v1693, 0.0
    %v1700 = vmax.f32 %v1696, 0.0
    %v1701 = vpack.c.bf16 %v1700, %v1699
    %v1702 = vld [vmem:[#allocation6] sm:$0xf]
    %v1703 = vld [vmem:[#allocation6 + $0x4] sm:$0xf]
    %v1704 = vld [vmem:[#allocation6 + $0x8] sm:$0xf]
    %v1705 = vld [vmem:[#allocation6 + $0xc] sm:$0xf]
    %v1706 = vld [vmem:[#allocation6 + $0x10] sm:$0xf]
    %v1707 = vld [vmem:[#allocation6 + $0x14] sm:$0xf]
    %v1708 = vld [vmem:[#allocation6 + $0x18] sm:$0xf]
    %v1709 = vld [vmem:[#allocation6 + $0x1c] sm:$0xf]
    %v1710 = vld [vmem:[#allocation6 + $0x20] sm:$0xf]
    %v1711 = vld [vmem:[#allocation6 + $0x24] sm:$0xf]
    %v1712 = vld [vmem:[#allocation6 + $0x28] sm:$0xf]
    %v1713 = vld [vmem:[#allocation6 + $0x2c] sm:$0xf]
    %v1714 = vld [vmem:[#allocation6 + $0x30] sm:$0xf]
    %v1715 = vld [vmem:[#allocation6 + $0x34] sm:$0xf]
    %v1716 = vld [vmem:[#allocation6 + $0x38] sm:$0xf]
    %v1717 = vld [vmem:[#allocation6 + $0x3c] sm:$0xf]
    %v1718 = vld [vmem:[%s8] sm:$0x1]
    %v1720 = vlaneseq
    %v1721 = vshrl.u32 %v1720, 7
    %v1722 = vsub.s32 0, %v1721
    %v1723 = vrot.slane %v1718, %v1722
    %v1741 = vunpack.c.l.b16 %v1702
    %v1742 = vunpack.c.l.b16 %v1703
    %v1743 = vunpack.c.l.b16 %v1704
    %v1744 = vunpack.c.l.b16 %v1705
    %v1745 = vunpack.c.l.b16 %v1706
    %v1746 = vunpack.c.l.b16 %v1707
    %v1747 = vunpack.c.l.b16 %v1708
    %v1748 = vunpack.c.l.b16 %v1709
    %v1749 = vunpack.c.l.b16 %v1710
    %v1750 = vunpack.c.l.b16 %v1711
    %v1751 = vunpack.c.l.b16 %v1712
    %v1752 = vunpack.c.l.b16 %v1713
    %v1753 = vunpack.c.l.b16 %v1714
    %v1754 = vunpack.c.l.b16 %v1715
    %v1755 = vunpack.c.l.b16 %v1716
    %v1756 = vunpack.c.l.b16 %v1717
    %v1757 = vpack.c.b16 %v1742, %v1741
    %v1758 = vpack.c.b16 %v1744, %v1743
    %v1759 = vpack.c.b16 %v1746, %v1745
    %v1760 = vpack.c.b16 %v1748, %v1747
    %v1761 = vpack.c.b16 %v1750, %v1749
    %v1762 = vpack.c.b16 %v1752, %v1751
    %v1763 = vpack.c.b16 %v1754, %v1753
    %v1764 = vpack.c.b16 %v1756, %v1755
    %1773 = vmatprep.subr.bf16.mxu0 0
    %1774 = vmatpush1.bf16.msra.mxu0 %v1757
    %1775 = vmatprep.subr.bf16.mxu0 0
    %1776 = vmatpush1.bf16.msra.mxu0 %v1758
    %1777 = vmatprep.subr.bf16.mxu0 0
    %1778 = vmatpush1.bf16.msra.mxu0 %v1759
    %1779 = vmatprep.subr.bf16.mxu0 0
    %1780 = vmatpush1.bf16.msra.mxu0 %v1760
    %1781 = vmatprep.subr.bf16.mxu0 0
    %1782 = vmatpush1.bf16.msra.mxu0 %v1761
    %1783 = vmatprep.subr.bf16.mxu0 0
    %1784 = vmatpush1.bf16.msra.mxu0 %v1762
    %1785 = vmatprep.subr.bf16.mxu0 0
    %1786 = vmatpush1.bf16.msra.mxu0 %v1763
    %1787 = vmatprep.subr.bf16.mxu0 0
    %1788 = vmatpush1.bf16.msra.mxu0 %v1764
    %1789 = vmatprep.subr.bf16.mxu0 0
    %1790 = vmatpush1.bf16.msra.mxu0 0
    %1791 = vmatprep.subr.bf16.mxu0 0
    %1792 = vmatpush1.bf16.msra.mxu0 0
    %1793 = vmatprep.subr.bf16.mxu0 0
    %1794 = vmatpush1.bf16.msra.mxu0 0
    %1795 = vmatprep.subr.bf16.mxu0 0
    %1796 = vmatpush1.bf16.msra.mxu0 0
    %1797 = vmatprep.subr.bf16.mxu0 0
    %1798 = vmatpush1.bf16.msra.mxu0 0
    %1799 = vmatprep.subr.bf16.mxu0 0
    %1800 = vmatpush1.bf16.msra.mxu0 0
    %1801 = vmatprep.subr.bf16.mxu0 0
    %1802 = vmatpush1.bf16.msra.mxu0 0
    %1803 = vmatprep.subr.bf16.mxu0 0
    %1804 = vmatpush1.bf16.msra.mxu0 0
    %1805 = vmatprep.mubr.bf16.mxu0 0
    %1806 = vmatmul.mubr.bf16.gmra.mrb[0].mxu0 %v1701
    %v1807 = vpop.f32.mrb[0].mxu0
    %v1808 = vadd.f32 %v1723, %v1807
    %v1809 = vpop.f32.mrb[0].mxu0
    %v1810 = vpop.f32.mrb[0].mxu0
    %v1811 = vadd.f32 %v1723, %v1810
    %v1812 = vpop.f32.mrb[0].mxu0
    %1813 = vdwg.mxu0
    %v1814 = vxor.u32 %v1808, 2147483648
    %v1815 = vxor.u32 %v1811, 2147483648
    %v1816 = vmul.f32 %v1814, 1.442695
    %v1817 = vpow.pop %v1816
    %v1818 = vmul.f32 %v1815, 1.442695
    %v1819 = vpow.pop %v1818
    %v1820 = vadd.f32 %v1817, 1.0
    %v1821 = vadd.f32 %v1819, 1.0
    %v1822 = vrcp.pop %v1820
    %v1823 = vmul.f32 1.0, %v1822
    %v1824 = vrcp.pop %v1821
    %v1825 = vmul.f32 1.0, %v1824
    %v1826 = vpack.c.bf16 %v1825, %v1823
    %v1828 = vunpack.c.l.b16 %v1826
    %v1829 = vunpack.c.h.b16 %v1826
    %v1830 = vpack.c.b16 %v1828, %v1828
    %v1831 = vpack.c.b16 %v1829, %v1829
    %1834 = vst [vmem:[%s9] sm:$0xf] %v1830
    %1835 = vst [vmem:[%s9 + $0x4] sm:$0xf] %v1831
    // Predicated region
    $region50: #{net_forward.1} parent=1 // pred_check
      _
    $region51: #{net_forward.1} parent=1 // pred_check_branch
      %1837 = sbr.rel (0) target = $region53
    $region52: #{net_forward.1} parent=1 // pred_region
      _
    $region53: #{net_forward.1} parent=1 // pred_fallthru
      _
    // Predicated region
    $region54: #{net_forward.1} parent=1 // pred_check
      _
    $region55: #{net_forward.1} parent=1 // pred_check_branch
      %1839 = sbr.rel (0) target = $region57
    $region56: #{net_forward.1} parent=1 // pred_region
      _
    $region57: #{net_forward.1} parent=1 // pred_fallthru
      _
    %1840 = vsyncpa [#allocation3], 1
    %1841 = vsyncpa [#allocation5], 1

</llo_original>
